<compile_context>
chip_gen: v6e
topology: v6e:2x2x1
jax: 0.10.0
libtpu: 0.0.40
codegen_flags: <defaults>
</compile_context>

<pallas_src>
import functools

import jax
import jax.numpy as jnp
from jax import lax
from jax.experimental import pallas as pl
from jax.experimental.pallas import tpu as pltpu
import numpy as np


def _round_up(v, m):
    return ((v + m - 1) // m) * m


def qgsn_kernel(xid_ref, eidx_ref, eir_ref, ec_ref,
                w1i_ref, w1j_ref, b1_ref, w2_ref, b2_ref,
                u1x_ref, u1m_ref, c1_ref, u2p_ref, c2p_ref,
                out_ref, *, d_x, d_id):
    """Gb graphs per grid step: gather -> msg MLP -> edge scale -> scatter-add -> update MLP."""
    f32 = jnp.float32
    Npt = xid_ref.shape[0]          # Gb * padded node count
    Ept = eidx_ref.shape[0]         # Gb * padded edge count
    d_cent = d_x + d_id             # column of node_centrality inside xid

    xid = xid_ref[...]              # (Npt, Dx+Did+1) = [x||degrees||identifiers||node_centrality]
    ei_col = eidx_ref[:, 0:1]       # (Ept, 1) target node index per edge (offset per local graph)
    ej_col = eidx_ref[:, 1:2]       # (Ept, 1) source node index per edge

    # --- one-hots built with VPU compares (cheap filler next to the MXU work) ---
    iota_en = lax.broadcasted_iota(jnp.int32, (Ept, Npt), 1)        # node index along lanes
    o_i = (iota_en == ei_col).astype(f32)                           # (Ept, Npt) edge -> target node
    o_j = (iota_en == ej_col).astype(f32)                           # (Ept, Npt) edge -> source node
    # Transposed one-hot for the scatter-add: node index along dim 0 compared
    # against the (1, Ept) row of target indices -> o_i_t[n, e] = (n == ei[e]).
    iota_ne = lax.broadcasted_iota(jnp.int32, (Npt, Ept), 0)        # node index along sublanes
    o_i_t = (iota_ne == eir_ref[...]).astype(f32)                   # (Npt, Ept)

    # --- fused gather: one matmul per endpoint over [x_aug || identifiers || nc] ---
    xid_i = jnp.dot(o_i, xid, preferred_element_type=f32)           # (Ept, Dx+Did+1)
    xid_j = jnp.dot(o_j, xid, preferred_element_type=f32)           # (Ept, Dx+Did+1)

    # --- message MLP: msg_fn(cat(x_i, x_j, id_i, id_j)) as split-weight dots
    #     (w1i/w1j carry a zero row so the nc column is inert) ---
    h = (jnp.dot(xid_i, w1i_ref[...], preferred_element_type=f32)
         + jnp.dot(xid_j, w1j_ref[...], preferred_element_type=f32)
         + b1_ref[...])
    h = jnp.maximum(h, 0.0)                                          # ReLU
    msgs = (jnp.dot(h, w2_ref[...], preferred_element_type=f32)
            + b2_ref[...]) * ec_ref[...]                             # (Ept, Dmsg), msg_j *= edge_centrality

    # --- scatter-add aggregation to target nodes (aggr='add') ---
    message = jnp.dot(o_i_t, msgs, preferred_element_type=f32)       # (Npt, Dmsg)

    # --- update MLP: update_fn(cat(x * node_centrality, message)) ---
    xc = xid[:, :d_x] * xid[:, d_cent:d_cent + 1]                    # (Npt, Dx)
    u = (jnp.dot(xc, u1x_ref[...], preferred_element_type=f32)
         + jnp.dot(message, u1m_ref[...], preferred_element_type=f32)
         + c1_ref[...])
    u = jnp.maximum(u, 0.0)                                          # ReLU
    # Output is lane-padded to a multiple of 128 (u2/c2 zero-padded in the
    # wrapper) so every store is a full, unmasked vector store.
    out_ref[...] = jnp.dot(u, u2p_ref[...], preferred_element_type=f32) + c2p_ref[...]


def _pick_graphs_per_block(G, Np, Ep, onehot_budget_bytes=8 << 20):
    """Largest Gb that divides G, keeps >=2 grid steps, and keeps the f32 one-hots small."""
    best = 1
    for gb in range(2, G + 1):
        if G % gb != 0:
            continue
        if G // gb < 2:                       # keep >=2 (and even) steps for v7x's 2 TCs
            continue
        if 3 * (gb * Ep) * (gb * Np) * 4 > onehot_budget_bytes:
            continue
        best = gb
    return best


def qgsn_sparse_forward(x, degrees, identifiers, node_centrality, edge_centrality,
                        edge_index, params, graphs_per_block=None):
    """Batched Pallas forward of QGSN_sparse (general / global / add / src->tgt).

    All graph inputs carry a leading graph axis G (graphs share parameters):
      x (G,N,d_in), degrees (G,N,d_deg), identifiers (G,N,d_id),
      node_centrality (G,N), edge_centrality (G,E), edge_index (G,2,E).
    """
    x = jnp.asarray(x, jnp.float32)
    degrees = jnp.asarray(degrees, jnp.float32)
    identifiers = jnp.asarray(identifiers, jnp.float32)
    G, N, _ = x.shape
    E = edge_index.shape[2]
    d_x = x.shape[-1] + degrees.shape[-1]      # degree_as_tag=True, retain_features=True
    d_id = identifiers.shape[-1]
    d_h = params["b1"].shape[-1]
    d_up = params["u2"].shape[1]

    Np = _round_up(N, 8)
    Ep = _round_up(E, 8)
    d_out_pad = _round_up(d_up, 128)           # lane-dense output width

    Gb = graphs_per_block if graphs_per_block is not None else _pick_graphs_per_block(G, Np, Ep)
    assert G % Gb == 0
    nb = G // Gb                               # grid steps
    Npt = Gb * Np                              # nodes per step
    Ept = Gb * Ep                              # edges per step

    # x = cat(x, degrees); pack identifiers and node_centrality alongside.
    x_aug = jnp.concatenate([x, degrees], axis=-1)                       # (G,N,Dx)
    nc = jnp.asarray(node_centrality, jnp.float32).reshape(G, N, 1)
    xid = jnp.concatenate([x_aug, identifiers, nc], axis=-1)             # (G,N,Dx+Did+1)
    xid = jnp.pad(xid, ((0, 0), (0, Np - N), (0, 0)))
    xid = xid.reshape(nb, Npt, xid.shape[-1])

    ec = jnp.pad(jnp.asarray(edge_centrality, jnp.float32), ((0, 0), (0, Ep - E)))
    ec = ec.reshape(nb, Ept, 1)

    # flow='source_to_target': i = edge_index[1] (target), j = edge_index[0] (source).
    # Offset indices by local_graph*Np so one big one-hot covers the Gb-graph slab;
    # padded edges get an out-of-range index (all-zero one-hot rows, inert for add-aggr).
    local_off = (jnp.arange(G, dtype=jnp.int32) % Gb)[:, None] * Np       # (G,1)
    ei = jnp.asarray(edge_index[:, 1, :], jnp.int32) + local_off
    ej = jnp.asarray(edge_index[:, 0, :], jnp.int32) + local_off
    ei = jnp.pad(ei, ((0, 0), (0, Ep - E)), constant_values=Npt)
    ej = jnp.pad(ej, ((0, 0), (0, Ep - E)), constant_values=Npt)
    ei = ei.reshape(nb, Ept)
    ej = ej.reshape(nb, Ept)
    eidx_col = jnp.stack([ei, ej], axis=-1)                               # (nb, Ept, 2)
    ei_row = ei.reshape(nb, 1, Ept)                                       # (nb, 1, Ept)

    # Fused / padded weights.  Extra zero row makes the nc column of xid inert
    # in the message MLP's first layer.
    zrow = jnp.zeros((1, d_h), jnp.float32)
    w1_i = jnp.concatenate([params["w1_xi"], params["w1_idi"], zrow], axis=0)  # (Dx+Did+1, d_h)
    w1_j = jnp.concatenate([params["w1_xj"], params["w1_idj"], zrow], axis=0)  # (Dx+Did+1, d_h)
    u2p = jnp.pad(params["u2"], ((0, 0), (0, d_out_pad - d_up)))               # (d_h, 128k)
    c2p = jnp.pad(params["c2"], ((0, 0), (0, d_out_pad - d_up)))               # (1, 128k)

    graph_inputs = (xid, eidx_col, ei_row, ec)
    weight_inputs = (w1_i, w1_j, params["b1"], params["w2"], params["b2"],
                     params["u1_x"], params["u1_m"], params["c1"], u2p, c2p)

    def graph_spec(a):
        # Squeeze the block (graph-slab) dim; each grid step sees one slab's full block.
        return pl.BlockSpec((None,) + a.shape[1:], lambda g: (g, 0, 0))

    def weight_spec(a):
        # Shared weights: constant block index -> fetched once, stays resident.
        return pl.BlockSpec(a.shape, lambda g: (0, 0))

    out = pl.pallas_call(
        functools.partial(qgsn_kernel, d_x=d_x, d_id=d_id),
        out_shape=jax.ShapeDtypeStruct((nb, Npt, d_out_pad), jnp.float32),
        grid=(nb,),
        in_specs=[graph_spec(a) for a in graph_inputs]
                 + [weight_spec(w) for w in weight_inputs],
        out_specs=pl.BlockSpec((None, Npt, d_out_pad), lambda g: (g, 0, 0)),
        compiler_params=pltpu.CompilerParams(
            dimension_semantics=("parallel",)),
    )(*graph_inputs, *weight_inputs)

    # Undo batching / padding (padded node rows carry relu(c1)@u2+c2; sliced off here).
    out = out.reshape(G, Np, d_out_pad)
    return out[:, :N, :d_up]


def _reference_single(x, degrees, identifiers, node_centrality, edge_centrality,
                      edge_index, params):
    """Pure-JAX single-graph reference mirroring the PyTorch forward exactly."""
    x_aug = jnp.concatenate([x, degrees], axis=-1).astype(jnp.float32)
    N = x_aug.shape[0]
    ei = edge_index[1]
    ej = edge_index[0]
    x_i, x_j = x_aug[ei], x_aug[ej]
    id_i, id_j = identifiers[ei], identifiers[ej]
    msg_in = jnp.concatenate([x_i, x_j, id_i, id_j], axis=-1)
    W1 = jnp.concatenate([params["w1_xi"], params["w1_xj"],
                          params["w1_idi"], params["w1_idj"]], axis=0)
    h = jnp.maximum(msg_in @ W1 + params["b1"], 0.0)
    msgs = (h @ params["w2"] + params["b2"]) * edge_centrality[:, None]
    message = jnp.zeros((N, msgs.shape[1]), jnp.float32).at[ei].add(msgs)
    upd_in = jnp.concatenate([x_aug * node_centrality[:, None], message], axis=-1)
    U1 = jnp.concatenate([params["u1_x"], params["u1_m"]], axis=0)
    u = jnp.maximum(upd_in @ U1 + params["c1"], 0.0)
    return u @ params["u2"] + params["c2"]


def init_params(key, d_x, d_id, d_msg, d_up, d_h):
    keys = jax.random.split(key, 8)

    def lin(k, fan_in, fan_out):
        return (jax.random.normal(k, (fan_in, fan_out), jnp.float32)
                / jnp.sqrt(jnp.float32(fan_in)))

    # msg_fn: Linear(2*(d_x + d_id) -> d_h) -> ReLU -> Linear(d_h -> d_msg)
    w1 = lin(keys[0], 2 * (d_x + d_id), d_h)
    params = {
        "w1_xi": w1[:d_x],
        "w1_xj": w1[d_x:2 * d_x],
        "w1_idi": w1[2 * d_x:2 * d_x + d_id],
        "w1_idj": w1[2 * d_x + d_id:],
        "b1": jax.random.normal(keys[1], (1, d_h), jnp.float32) * 0.1,
        "w2": lin(keys[2], d_h, d_msg),
        "b2": jax.random.normal(keys[3], (1, d_msg), jnp.float32) * 0.1,
    }
    # update_fn: Linear(d_x + d_msg -> d_h) -> ReLU -> Linear(d_h -> d_up)
    u1 = lin(keys[4], d_x + d_msg, d_h)
    params.update({
        "u1_x": u1[:d_x],
        "u1_m": u1[d_x:],
        "c1": jax.random.normal(keys[5], (1, d_h), jnp.float32) * 0.1,
        "u2": lin(keys[6], d_h, d_up),
        "c2": jax.random.normal(keys[7], (1, d_up), jnp.float32) * 0.1,
    })
    return params
    # TODO(synk): BatchNorm inside mlp (bn=True) and the msg_kind='gin' /
    # id_scope='local' / aggr='mean' branches of the module are not exercised
    # in this configuration.


if __name__ == "__main__":
    key = jax.random.PRNGKey(0)
    k_x, k_deg, k_id, k_nc, k_ec, k_edge, k_par = jax.random.split(key, 7)

    G, N, E = 4, 32, 64            # graphs, nodes/graph, edges/graph
    d_in, d_degree, d_id = 8, 8, 8
    d_msg, d_up, d_h = 16, 16, 32
    d_x = d_in + d_degree          # degree_as_tag=True, retain_features=True

    x = jax.random.normal(k_x, (G, N, d_in), jnp.float32)
    degrees = jax.random.normal(k_deg, (G, N, d_degree), jnp.float32)
    identifiers = jax.random.normal(k_id, (G, N, d_id), jnp.float32)
    node_centrality = jax.random.uniform(k_nc, (G, N), jnp.float32)
    edge_centrality = jax.random.uniform(k_ec, (G, E), jnp.float32)
    edge_index = jax.random.randint(k_edge, (G, 2, E), 0, N, jnp.int32)

    params = init_params(k_par, d_x, d_id, d_msg, d_up, d_h)

    out = qgsn_sparse_forward(x, degrees, identifiers, node_centrality,
                              edge_centrality, edge_index, params)
    out = jax.block_until_ready(out)

    ref = jnp.stack([_reference_single(x[g], degrees[g], identifiers[g],
                                       node_centrality[g], edge_centrality[g],
                                       edge_index[g], params)
                     for g in range(G)])
    np.testing.assert_allclose(np.asarray(out), np.asarray(ref), rtol=1e-4, atol=1e-4)

    print("KERNEL_OK")
</pallas_src>

<mosaic_0001>
module attributes {stable_mosaic.version = 11 : i64} {
  func.func @qgsn_kernel(%arg0: i32, %arg1: memref<1x64x25xf32, #tpu.memory_space<vmem>>, %arg2: memref<1x128x2xi32, #tpu.memory_space<vmem>>, %arg3: memref<1x1x128xi32, #tpu.memory_space<vmem>>, %arg4: memref<1x128x1xf32, #tpu.memory_space<vmem>>, %arg5: memref<25x32xf32, #tpu.memory_space<vmem>>, %arg6: memref<25x32xf32, #tpu.memory_space<vmem>>, %arg7: memref<1x32xf32, #tpu.memory_space<vmem>>, %arg8: memref<32x16xf32, #tpu.memory_space<vmem>>, %arg9: memref<1x16xf32, #tpu.memory_space<vmem>>, %arg10: memref<16x32xf32, #tpu.memory_space<vmem>>, %arg11: memref<16x32xf32, #tpu.memory_space<vmem>>, %arg12: memref<1x32xf32, #tpu.memory_space<vmem>>, %arg13: memref<32x128xf32, #tpu.memory_space<vmem>>, %arg14: memref<1x128xf32, #tpu.memory_space<vmem>>, %arg15: memref<1x64x128xf32, #tpu.memory_space<vmem>>) attributes {dimension_semantics = [#tpu.dimension_semantics<parallel>], iteration_bounds = array<i64: 2>, scalar_prefetch = 0 : i64, scratch_operands = 0 : i64, tpu.core_type = #tpu.core_type<tc>, window_params = [{transform_indices = @transform_0, window_bounds = array<i64: 1, 64, 25>}, {transform_indices = @transform_1, window_bounds = array<i64: 1, 128, 2>}, {transform_indices = @transform_2, window_bounds = array<i64: 1, 1, 128>}, {transform_indices = @transform_3, window_bounds = array<i64: 1, 128, 1>}, {pipeline_mode = #tpu.pipeline_mode<synchronous>, transform_indices = @transform_4, window_bounds = array<i64: 25, 32>}, {pipeline_mode = #tpu.pipeline_mode<synchronous>, transform_indices = @transform_5, window_bounds = array<i64: 25, 32>}, {pipeline_mode = #tpu.pipeline_mode<synchronous>, transform_indices = @transform_6, window_bounds = array<i64: 1, 32>}, {pipeline_mode = #tpu.pipeline_mode<synchronous>, transform_indices = @transform_7, window_bounds = array<i64: 32, 16>}, {pipeline_mode = #tpu.pipeline_mode<synchronous>, transform_indices = @transform_8, window_bounds = array<i64: 1, 16>}, {pipeline_mode = #tpu.pipeline_mode<synchronous>, transform_indices = @transform_9, window_bounds = array<i64: 16, 32>}, {pipeline_mode = #tpu.pipeline_mode<synchronous>, transform_indices = @transform_10, window_bounds = array<i64: 16, 32>}, {pipeline_mode = #tpu.pipeline_mode<synchronous>, transform_indices = @transform_11, window_bounds = array<i64: 1, 32>}, {pipeline_mode = #tpu.pipeline_mode<synchronous>, transform_indices = @transform_12, window_bounds = array<i64: 32, 128>}, {pipeline_mode = #tpu.pipeline_mode<synchronous>, transform_indices = @transform_13, window_bounds = array<i64: 1, 128>}, {transform_indices = @transform_14, window_bounds = array<i64: 1, 64, 128>}]} {
    %c0 = arith.constant 0 : index
    %c0_0 = arith.constant 0 : index
    %c0_1 = arith.constant 0 : index
    %0 = vector.load %arg1[%c0, %c0_0, %c0_1] : memref<1x64x25xf32, #tpu.memory_space<vmem>>, vector<1x64x25xf32>
    %1 = vector.shape_cast %0 : vector<1x64x25xf32> to vector<64x25xf32>
    %c0_2 = arith.constant 0 : index
    %c0_3 = arith.constant 0 : index
    %c0_4 = arith.constant 0 : index
    %2 = vector.load %arg2[%c0_2, %c0_3, %c0_4] : memref<1x128x2xi32, #tpu.memory_space<vmem>>, vector<1x128x1xi32>
    %3 = vector.shape_cast %2 : vector<1x128x1xi32> to vector<128x1xi32>
    %c0_5 = arith.constant 0 : index
    %c0_6 = arith.constant 0 : index
    %c1 = arith.constant 1 : index
    %4 = vector.load %arg2[%c0_5, %c0_6, %c1] : memref<1x128x2xi32, #tpu.memory_space<vmem>>, vector<1x128x1xi32>
    %5 = vector.shape_cast %4 : vector<1x128x1xi32> to vector<128x1xi32>
    %6 = tpu.iota {dimensions = array<i32: 1>} : vector<128x64xi32>
    %7 = vector.broadcast %3 : vector<128x1xi32> to vector<128x64xi32>
    %8 = arith.cmpi eq, %6, %7 : vector<128x64xi32>
    %9 = arith.extui %8 : vector<128x64xi1> to vector<128x64xi32>
    %10 = arith.sitofp %9 : vector<128x64xi32> to vector<128x64xf32>
    %11 = vector.broadcast %5 : vector<128x1xi32> to vector<128x64xi32>
    %12 = arith.cmpi eq, %6, %11 : vector<128x64xi32>
    %13 = arith.extui %12 : vector<128x64xi1> to vector<128x64xi32>
    %14 = arith.sitofp %13 : vector<128x64xi32> to vector<128x64xf32>
    %15 = tpu.iota {dimensions = array<i32: 0>} : vector<64x128xi32>
    %c0_7 = arith.constant 0 : index
    %c0_8 = arith.constant 0 : index
    %c0_9 = arith.constant 0 : index
    %16 = vector.load %arg3[%c0_7, %c0_8, %c0_9] : memref<1x1x128xi32, #tpu.memory_space<vmem>>, vector<1x1x128xi32>
    %17 = vector.shape_cast %16 : vector<1x1x128xi32> to vector<1x128xi32>
    %18 = vector.broadcast %17 : vector<1x128xi32> to vector<64x128xi32>
    %19 = arith.cmpi eq, %15, %18 : vector<64x128xi32>
    %20 = arith.extui %19 : vector<64x128xi1> to vector<64x128xi32>
    %21 = arith.sitofp %20 : vector<64x128xi32> to vector<64x128xf32>
    %cst = arith.constant dense<0.000000e+00> : vector<128x25xf32>
    %22 = tpu.matmul %10, %1, %cst {dimension_numbers = #tpu.dot_dimension_numbers<[1], [0], [0], [1], [0, 0, 1, 1], [], []>} : vector<128x64xf32>, vector<64x25xf32>, vector<128x25xf32> -> vector<128x25xf32>
    %cst_10 = arith.constant dense<0.000000e+00> : vector<128x25xf32>
    %23 = tpu.matmul %14, %1, %cst_10 {dimension_numbers = #tpu.dot_dimension_numbers<[1], [0], [0], [1], [0, 0, 1, 1], [], []>} : vector<128x64xf32>, vector<64x25xf32>, vector<128x25xf32> -> vector<128x25xf32>
    %c0_11 = arith.constant 0 : index
    %c0_12 = arith.constant 0 : index
    %24 = vector.load %arg5[%c0_11, %c0_12] : memref<25x32xf32, #tpu.memory_space<vmem>>, vector<25x32xf32>
    %cst_13 = arith.constant dense<0.000000e+00> : vector<128x32xf32>
    %25 = tpu.matmul %22, %24, %cst_13 {dimension_numbers = #tpu.dot_dimension_numbers<[1], [0], [0], [1], [0, 0, 1, 1], [], []>} : vector<128x25xf32>, vector<25x32xf32>, vector<128x32xf32> -> vector<128x32xf32>
    %c0_14 = arith.constant 0 : index
    %c0_15 = arith.constant 0 : index
    %26 = vector.load %arg6[%c0_14, %c0_15] : memref<25x32xf32, #tpu.memory_space<vmem>>, vector<25x32xf32>
    %cst_16 = arith.constant dense<0.000000e+00> : vector<128x32xf32>
    %27 = tpu.matmul %23, %26, %cst_16 {dimension_numbers = #tpu.dot_dimension_numbers<[1], [0], [0], [1], [0, 0, 1, 1], [], []>} : vector<128x25xf32>, vector<25x32xf32>, vector<128x32xf32> -> vector<128x32xf32>
    %28 = arith.addf %25, %27 : vector<128x32xf32>
    %c0_17 = arith.constant 0 : index
    %c0_18 = arith.constant 0 : index
    %29 = vector.load %arg7[%c0_17, %c0_18] : memref<1x32xf32, #tpu.memory_space<vmem>>, vector<1x32xf32>
    %30 = vector.broadcast %29 : vector<1x32xf32> to vector<128x32xf32>
    %31 = arith.addf %28, %30 : vector<128x32xf32>
    %cst_19 = arith.constant 0.000000e+00 : f32
    %32 = vector.broadcast %cst_19 : f32 to vector<128x32xf32>
    %33 = arith.maximumf %31, %32 : vector<128x32xf32>
    %c0_20 = arith.constant 0 : index
    %c0_21 = arith.constant 0 : index
    %34 = vector.load %arg8[%c0_20, %c0_21] : memref<32x16xf32, #tpu.memory_space<vmem>>, vector<32x16xf32>
    %cst_22 = arith.constant dense<0.000000e+00> : vector<128x16xf32>
    %35 = tpu.matmul %33, %34, %cst_22 {dimension_numbers = #tpu.dot_dimension_numbers<[1], [0], [0], [1], [0, 0, 1, 1], [], []>} : vector<128x32xf32>, vector<32x16xf32>, vector<128x16xf32> -> vector<128x16xf32>
    %c0_23 = arith.constant 0 : index
    %c0_24 = arith.constant 0 : index
    %36 = vector.load %arg9[%c0_23, %c0_24] : memref<1x16xf32, #tpu.memory_space<vmem>>, vector<1x16xf32>
    %37 = vector.broadcast %36 : vector<1x16xf32> to vector<128x16xf32>
    %38 = arith.addf %35, %37 : vector<128x16xf32>
    %c0_25 = arith.constant 0 : index
    %c0_26 = arith.constant 0 : index
    %c0_27 = arith.constant 0 : index
    %39 = vector.load %arg4[%c0_25, %c0_26, %c0_27] : memref<1x128x1xf32, #tpu.memory_space<vmem>>, vector<1x128x1xf32>
    %40 = vector.shape_cast %39 : vector<1x128x1xf32> to vector<128x1xf32>
    %41 = vector.broadcast %40 : vector<128x1xf32> to vector<128x16xf32>
    %42 = arith.mulf %38, %41 : vector<128x16xf32>
    %cst_28 = arith.constant dense<0.000000e+00> : vector<64x16xf32>
    %43 = tpu.matmul %21, %42, %cst_28 {dimension_numbers = #tpu.dot_dimension_numbers<[1], [0], [0], [1], [0, 0, 1, 1], [], []>} : vector<64x128xf32>, vector<128x16xf32>, vector<64x16xf32> -> vector<64x16xf32>
    %44 = vector.extract_strided_slice %1 {offsets = [0, 0], sizes = [64, 16], strides = [1, 1]} : vector<64x25xf32> to vector<64x16xf32>
    %45 = vector.extract_strided_slice %1 {offsets = [0, 24], sizes = [64, 1], strides = [1, 1]} : vector<64x25xf32> to vector<64x1xf32>
    %46 = vector.broadcast %45 : vector<64x1xf32> to vector<64x16xf32>
    %47 = arith.mulf %44, %46 : vector<64x16xf32>
    %c0_29 = arith.constant 0 : index
    %c0_30 = arith.constant 0 : index
    %48 = vector.load %arg10[%c0_29, %c0_30] : memref<16x32xf32, #tpu.memory_space<vmem>>, vector<16x32xf32>
    %cst_31 = arith.constant dense<0.000000e+00> : vector<64x32xf32>
    %49 = tpu.matmul %47, %48, %cst_31 {dimension_numbers = #tpu.dot_dimension_numbers<[1], [0], [0], [1], [0, 0, 1, 1], [], []>} : vector<64x16xf32>, vector<16x32xf32>, vector<64x32xf32> -> vector<64x32xf32>
    %c0_32 = arith.constant 0 : index
    %c0_33 = arith.constant 0 : index
    %50 = vector.load %arg11[%c0_32, %c0_33] : memref<16x32xf32, #tpu.memory_space<vmem>>, vector<16x32xf32>
    %cst_34 = arith.constant dense<0.000000e+00> : vector<64x32xf32>
    %51 = tpu.matmul %43, %50, %cst_34 {dimension_numbers = #tpu.dot_dimension_numbers<[1], [0], [0], [1], [0, 0, 1, 1], [], []>} : vector<64x16xf32>, vector<16x32xf32>, vector<64x32xf32> -> vector<64x32xf32>
    %52 = arith.addf %49, %51 : vector<64x32xf32>
    %c0_35 = arith.constant 0 : index
    %c0_36 = arith.constant 0 : index
    %53 = vector.load %arg12[%c0_35, %c0_36] : memref<1x32xf32, #tpu.memory_space<vmem>>, vector<1x32xf32>
    %54 = vector.broadcast %53 : vector<1x32xf32> to vector<64x32xf32>
    %55 = arith.addf %52, %54 : vector<64x32xf32>
    %cst_37 = arith.constant 0.000000e+00 : f32
    %56 = vector.broadcast %cst_37 : f32 to vector<64x32xf32>
    %57 = arith.maximumf %55, %56 : vector<64x32xf32>
    %c0_38 = arith.constant 0 : index
    %c0_39 = arith.constant 0 : index
    %58 = vector.load %arg13[%c0_38, %c0_39] : memref<32x128xf32, #tpu.memory_space<vmem>>, vector<32x128xf32>
    %cst_40 = arith.constant dense<0.000000e+00> : vector<64x128xf32>
    %59 = tpu.matmul %57, %58, %cst_40 {dimension_numbers = #tpu.dot_dimension_numbers<[1], [0], [0], [1], [0, 0, 1, 1], [], []>} : vector<64x32xf32>, vector<32x128xf32>, vector<64x128xf32> -> vector<64x128xf32>
    %c0_41 = arith.constant 0 : index
    %c0_42 = arith.constant 0 : index
    %60 = vector.load %arg14[%c0_41, %c0_42] : memref<1x128xf32, #tpu.memory_space<vmem>>, vector<1x128xf32>
    %61 = vector.broadcast %60 : vector<1x128xf32> to vector<64x128xf32>
    %62 = arith.addf %59, %61 : vector<64x128xf32>
    %c0_43 = arith.constant 0 : index
    %c0_44 = arith.constant 0 : index
    %c0_45 = arith.constant 0 : index
    %63 = vector.load %arg15[%c0_43, %c0_44, %c0_45] : memref<1x64x128xf32, #tpu.memory_space<vmem>>, vector<1x64x128xf32>
    %64 = vector.shape_cast %63 : vector<1x64x128xf32> to vector<64x128xf32>
    %65 = vector.shape_cast %62 : vector<64x128xf32> to vector<1x64x128xf32>
    tpu.vector_store %arg15[%c0_43, %c0_44, %c0_45], %65 {strides = array<i32>} : memref<1x64x128xf32, #tpu.memory_space<vmem>>, vector<1x64x128xf32>,
    return
  }
  func.func @transform_0(%arg0: i32) -> (i32, i32, i32) {
    %c0_i32 = arith.constant 0 : i32
    %c0_i32_0 = arith.constant 0 : i32
    %c0_i32_1 = arith.constant 0 : i32
    return %arg0, %c0_i32, %c0_i32_0 : i32, i32, i32
  }
  func.func @transform_1(%arg0: i32) -> (i32, i32, i32) {
    %c0_i32 = arith.constant 0 : i32
    %c0_i32_0 = arith.constant 0 : i32
    %c0_i32_1 = arith.constant 0 : i32
    return %arg0, %c0_i32, %c0_i32_0 : i32, i32, i32
  }
  func.func @transform_2(%arg0: i32) -> (i32, i32, i32) {
    %c0_i32 = arith.constant 0 : i32
    %c0_i32_0 = arith.constant 0 : i32
    %c0_i32_1 = arith.constant 0 : i32
    return %arg0, %c0_i32, %c0_i32_0 : i32, i32, i32
  }
  func.func @transform_3(%arg0: i32) -> (i32, i32, i32) {
    %c0_i32 = arith.constant 0 : i32
    %c0_i32_0 = arith.constant 0 : i32
    %c0_i32_1 = arith.constant 0 : i32
    return %arg0, %c0_i32, %c0_i32_0 : i32, i32, i32
  }
  func.func @transform_4(%arg0: i32) -> (i32, i32) {
    %c0_i32 = arith.constant 0 : i32
    %c0_i32_0 = arith.constant 0 : i32
    %c0_i32_1 = arith.constant 0 : i32
    return %c0_i32, %c0_i32_0 : i32, i32
  }
  func.func @transform_5(%arg0: i32) -> (i32, i32) {
    %c0_i32 = arith.constant 0 : i32
    %c0_i32_0 = arith.constant 0 : i32
    %c0_i32_1 = arith.constant 0 : i32
    return %c0_i32, %c0_i32_0 : i32, i32
  }
  func.func @transform_6(%arg0: i32) -> (i32, i32) {
    %c0_i32 = arith.constant 0 : i32
    %c0_i32_0 = arith.constant 0 : i32
    %c0_i32_1 = arith.constant 0 : i32
    return %c0_i32, %c0_i32_0 : i32, i32
  }
  func.func @transform_7(%arg0: i32) -> (i32, i32) {
    %c0_i32 = arith.constant 0 : i32
    %c0_i32_0 = arith.constant 0 : i32
    %c0_i32_1 = arith.constant 0 : i32
    return %c0_i32, %c0_i32_0 : i32, i32
  }
  func.func @transform_8(%arg0: i32) -> (i32, i32) {
    %c0_i32 = arith.constant 0 : i32
    %c0_i32_0 = arith.constant 0 : i32
    %c0_i32_1 = arith.constant 0 : i32
    return %c0_i32, %c0_i32_0 : i32, i32
  }
  func.func @transform_9(%arg0: i32) -> (i32, i32) {
    %c0_i32 = arith.constant 0 : i32
    %c0_i32_0 = arith.constant 0 : i32
    %c0_i32_1 = arith.constant 0 : i32
    return %c0_i32, %c0_i32_0 : i32, i32
  }
  func.func @transform_10(%arg0: i32) -> (i32, i32) {
    %c0_i32 = arith.constant 0 : i32
    %c0_i32_0 = arith.constant 0 : i32
    %c0_i32_1 = arith.constant 0 : i32
    return %c0_i32, %c0_i32_0 : i32, i32
  }
  func.func @transform_11(%arg0: i32) -> (i32, i32) {
    %c0_i32 = arith.constant 0 : i32
    %c0_i32_0 = arith.constant 0 : i32
    %c0_i32_1 = arith.constant 0 : i32
    return %c0_i32, %c0_i32_0 : i32, i32
  }
  func.func @transform_12(%arg0: i32) -> (i32, i32) {
    %c0_i32 = arith.constant 0 : i32
    %c0_i32_0 = arith.constant 0 : i32
    %c0_i32_1 = arith.constant 0 : i32
    return %c0_i32, %c0_i32_0 : i32, i32
  }
  func.func @transform_13(%arg0: i32) -> (i32, i32) {
    %c0_i32 = arith.constant 0 : i32
    %c0_i32_0 = arith.constant 0 : i32
    %c0_i32_1 = arith.constant 0 : i32
    return %c0_i32, %c0_i32_0 : i32, i32
  }
  func.func @transform_14(%arg0: i32) -> (i32, i32, i32) {
    %c0_i32 = arith.constant 0 : i32
    %c0_i32_0 = arith.constant 0 : i32
    %c0_i32_1 = arith.constant 0 : i32
    return %arg0, %c0_i32, %c0_i32_0 : i32, i32, i32
  }
}

</mosaic_0001>

<llo_original>
// kernel: tpu_custom_call.1
$region0: #{tpu_custom_call.1}
  #allocation0 [shape = 'u32[]', space=smem, size = 0x4, offset = 0x4, fixed_abs, tag = 'smem constant byte address 0x4 - core index']
  #allocation1 [shape = 'u32[144,128]{1,0:T(1,128)}', space=vmem, size = 0x12000, scoped, tag = 'internal scratch']
  %s0 = inlined_call_operand.vmem [shape: f32[2,64,25], index: 0, kind: input, shape index: {}]
  %s1 = inlined_call_operand.vmem [shape: s32[2,128,2], index: 1, kind: input, shape index: {}]
  %s2 = inlined_call_operand.vmem [shape: s32[2,1,128], index: 2, kind: input, shape index: {}]
  %s3 = inlined_call_operand.vmem [shape: f32[2,128,1], index: 3, kind: input, shape index: {}]
  %s4 = inlined_call_operand.vmem [shape: f32[25,32], index: 4, kind: input, shape index: {}]
  %s5 = inlined_call_operand.vmem [shape: f32[25,32], index: 5, kind: input, shape index: {}]
  %s6 = inlined_call_operand.vmem [shape: f32[1,32], index: 6, kind: input, shape index: {}]
  %s7 = inlined_call_operand.vmem [shape: f32[32,16], index: 7, kind: input, shape index: {}]
  %s8 = inlined_call_operand.vmem [shape: f32[1,16], index: 8, kind: input, shape index: {}]
  %s9 = inlined_call_operand.vmem [shape: f32[16,32], index: 9, kind: input, shape index: {}]
  %s10 = inlined_call_operand.vmem [shape: f32[16,32], index: 10, kind: input, shape index: {}]
  %s11 = inlined_call_operand.vmem [shape: f32[1,32], index: 11, kind: input, shape index: {}]
  %s12 = inlined_call_operand.vmem [shape: f32[32,128], index: 12, kind: input, shape index: {}]
  %s13 = inlined_call_operand.vmem [shape: f32[1,128], index: 13, kind: input, shape index: {}]
  %s14 = inlined_call_operand.hbm [shape: f32[2,64,128], index: 14, kind: output, shape index: {}]
  %s15 = sld [smem:[#allocation0]]
  $region89: #{tpu_custom_call.1} parent=0
    _
  %s17 = ssub.s32 1, %s15
  %s18 = scalar_select 0, %s17, %s15
  $region1: #{tpu_custom_call.1} parent=0
    #allocation2 [shape = 'u8[65536]{0}', space=vmem, size = 0x10000, scoped, tag = 'output window, operand 0']
    #allocation3 [shape = 's32[2]{0}', space=sflag, size = 0x8, scoped, tag = 'scoped memory for tpu_custom_call.1']
    %19 = vsyncpa [#allocation3], 0
    %s20 = scalar_lea.sflag [#allocation3], 1
    %21 = vsyncpa %s20, 0
    loop: start=0, step=1, limit=4
    $region2: #{tpu_custom_call.1} parent=1 // loop_pre_header
      _
    $region3: #{tpu_custom_call.1} parent=1 // loop_header
      %s23 = sphi 0, %s27
      %p24 = scmp.ge.s32.totalorder %s23, 4
      %s33 = sphi 0, %s35
      %s36 = sphi 0, %s33
      %s37 = sphi 0, %s36
      %s53 = sphi 0, %s37
      %s59 = sphi 0, %s61
      %s62 = sphi 0, %s59
      %s63 = sphi 0, %s62
      %s79 = sphi 0, %s63
      %s85 = sphi 0, %s87
      %s88 = sphi 0, %s85
      %s89 = sphi 0, %s88
      %s105 = sphi 0, %s89
      %s111 = sphi 0, %s113
      %s114 = sphi 0, %s111
      %s115 = sphi 0, %s114
      %s131 = sphi 0, %s115
      %s135 = sphi 0, %s135
      %s137 = sphi 0, %s135
      %s138 = sphi 0, %s137
      %s152 = sphi 0, %s138
      %s156 = sphi 0, %s156
      %s158 = sphi 0, %s156
      %s159 = sphi 0, %s158
      %s173 = sphi 0, %s159
      %s177 = sphi 0, %s177
      %s179 = sphi 0, %s177
      %s180 = sphi 0, %s179
      %s194 = sphi 0, %s180
      %s198 = sphi 0, %s198
      %s200 = sphi 0, %s198
      %s201 = sphi 0, %s200
      %s215 = sphi 0, %s201
      %s219 = sphi 0, %s219
      %s221 = sphi 0, %s219
      %s222 = sphi 0, %s221
      %s236 = sphi 0, %s222
      %s240 = sphi 0, %s240
      %s242 = sphi 0, %s240
      %s243 = sphi 0, %s242
      %s257 = sphi 0, %s243
      %s261 = sphi 0, %s261
      %s263 = sphi 0, %s261
      %s264 = sphi 0, %s263
      %s278 = sphi 0, %s264
      %s282 = sphi 0, %s282
      %s284 = sphi 0, %s282
      %s285 = sphi 0, %s284
      %s299 = sphi 0, %s285
      %s303 = sphi 0, %s303
      %s305 = sphi 0, %s303
      %s306 = sphi 0, %s305
      %s320 = sphi 0, %s306
      %s324 = sphi 0, %s324
      %s326 = sphi 0, %s324
      %s327 = sphi 0, %s326
      %s341 = sphi 0, %s327
      %s347 = sphi 0, %s349
      %s350 = sphi 0, %s347
      %s351 = sphi 0, %s350
      %s367 = sphi 0, %s351
    $region4: #{tpu_custom_call.1} parent=1 // loop_header_branch
      %26 = sbr.rel (%p24) target = $region8
    $region5: #{tpu_custom_call.1} parent=1 // loop_body
      %s28 = ssub.s32 %s23, 1
      %s29 = ssub.s32 %s23, 2
      %s30 = sadd.s32 %s23, 1
      %s31 = ssub.s32 %s23, %s30
      %p32 = scmp.eq.s32.totalorder %s31, 0
      %s34 = sadd.s32 %s33, 1
      %s35 = scalar_select %p32, %s33, %s34
      %p38 = pneg %p32
      %p39 = scmp.eq.s32.totalorder %s23, 1
      %p40 = por %p38, %p39
      %p41 = scmp.ne.s32.totalorder %s33, %s36
      %p42 = scmp.eq.s32.totalorder %s23, 0
      %p43 = por %p41, %p42
      %p44 = scmp.ne.s32.totalorder %s33, %s36
      %p45 = scmp.eq.s32.totalorder %s28, 1
      %p46 = por %p44, %p45
      %p47 = scmp.ne.s32.totalorder %s36, %s37
      %p48 = scmp.eq.s32.totalorder %s28, 0
      %p49 = por %p47, %p48
      %p50 = scmp.ne.s32.totalorder %s36, %s37
      %p51 = scmp.eq.s32.totalorder %s29, 1
      %p52 = por %p50, %p51
      %p54 = scmp.ne.s32.totalorder %s37, %s53
      %p55 = scmp.eq.s32.totalorder %s29, 0
      %p56 = por %p54, %p55
      %s57 = ssub.s32 %s23, %s30
      %p58 = scmp.eq.s32.totalorder %s57, 0
      %s60 = sadd.s32 %s59, 1
      %s61 = scalar_select %p58, %s59, %s60
      %p64 = pneg %p58
      %p65 = scmp.eq.s32.totalorder %s23, 1
      %p66 = por %p64, %p65
      %p67 = scmp.ne.s32.totalorder %s59, %s62
      %p68 = scmp.eq.s32.totalorder %s23, 0
      %p69 = por %p67, %p68
      %p70 = scmp.ne.s32.totalorder %s59, %s62
      %p71 = scmp.eq.s32.totalorder %s28, 1
      %p72 = por %p70, %p71
      %p73 = scmp.ne.s32.totalorder %s62, %s63
      %p74 = scmp.eq.s32.totalorder %s28, 0
      %p75 = por %p73, %p74
      %p76 = scmp.ne.s32.totalorder %s62, %s63
      %p77 = scmp.eq.s32.totalorder %s29, 1
      %p78 = por %p76, %p77
      %p80 = scmp.ne.s32.totalorder %s63, %s79
      %p81 = scmp.eq.s32.totalorder %s29, 0
      %p82 = por %p80, %p81
      %s83 = ssub.s32 %s23, %s30
      %p84 = scmp.eq.s32.totalorder %s83, 0
      %s86 = sadd.s32 %s85, 1
      %s87 = scalar_select %p84, %s85, %s86
      %p90 = pneg %p84
      %p91 = scmp.eq.s32.totalorder %s23, 1
      %p92 = por %p90, %p91
      %p93 = scmp.ne.s32.totalorder %s85, %s88
      %p94 = scmp.eq.s32.totalorder %s23, 0
      %p95 = por %p93, %p94
      %p96 = scmp.ne.s32.totalorder %s85, %s88
      %p97 = scmp.eq.s32.totalorder %s28, 1
      %p98 = por %p96, %p97
      %p99 = scmp.ne.s32.totalorder %s88, %s89
      %p100 = scmp.eq.s32.totalorder %s28, 0
      %p101 = por %p99, %p100
      %p102 = scmp.ne.s32.totalorder %s88, %s89
      %p103 = scmp.eq.s32.totalorder %s29, 1
      %p104 = por %p102, %p103
      %p106 = scmp.ne.s32.totalorder %s89, %s105
      %p107 = scmp.eq.s32.totalorder %s29, 0
      %p108 = por %p106, %p107
      %s109 = ssub.s32 %s23, %s30
      %p110 = scmp.eq.s32.totalorder %s109, 0
      %s112 = sadd.s32 %s111, 1
      %s113 = scalar_select %p110, %s111, %s112
      %p116 = pneg %p110
      %p117 = scmp.eq.s32.totalorder %s23, 1
      %p118 = por %p116, %p117
      %p119 = scmp.ne.s32.totalorder %s111, %s114
      %p120 = scmp.eq.s32.totalorder %s23, 0
      %p121 = por %p119, %p120
      %p122 = scmp.ne.s32.totalorder %s111, %s114
      %p123 = scmp.eq.s32.totalorder %s28, 1
      %p124 = por %p122, %p123
      %p125 = scmp.ne.s32.totalorder %s114, %s115
      %p126 = scmp.eq.s32.totalorder %s28, 0
      %p127 = por %p125, %p126
      %p128 = scmp.ne.s32.totalorder %s114, %s115
      %p129 = scmp.eq.s32.totalorder %s29, 1
      %p130 = por %p128, %p129
      %p132 = scmp.ne.s32.totalorder %s115, %s131
      %p133 = scmp.eq.s32.totalorder %s29, 0
      %p134 = por %p132, %p133
      %s136 = sadd.s32 %s135, 1
      %p139 = scmp.eq.s32.totalorder %s23, 1
      %p140 = scmp.ne.s32.totalorder %s135, %s137
      %p141 = scmp.eq.s32.totalorder %s23, 0
      %p142 = por %p140, %p141
      %p143 = scmp.ne.s32.totalorder %s135, %s137
      %p144 = scmp.eq.s32.totalorder %s28, 1
      %p145 = por %p143, %p144
      %p146 = scmp.ne.s32.totalorder %s137, %s138
      %p147 = scmp.eq.s32.totalorder %s28, 0
      %p148 = por %p146, %p147
      %p149 = scmp.ne.s32.totalorder %s137, %s138
      %p150 = scmp.eq.s32.totalorder %s29, 1
      %p151 = por %p149, %p150
      %p153 = scmp.ne.s32.totalorder %s138, %s152
      %p154 = scmp.eq.s32.totalorder %s29, 0
      %p155 = por %p153, %p154
      %s157 = sadd.s32 %s156, 1
      %p160 = scmp.eq.s32.totalorder %s23, 1
      %p161 = scmp.ne.s32.totalorder %s156, %s158
      %p162 = scmp.eq.s32.totalorder %s23, 0
      %p163 = por %p161, %p162
      %p164 = scmp.ne.s32.totalorder %s156, %s158
      %p165 = scmp.eq.s32.totalorder %s28, 1
      %p166 = por %p164, %p165
      %p167 = scmp.ne.s32.totalorder %s158, %s159
      %p168 = scmp.eq.s32.totalorder %s28, 0
      %p169 = por %p167, %p168
      %p170 = scmp.ne.s32.totalorder %s158, %s159
      %p171 = scmp.eq.s32.totalorder %s29, 1
      %p172 = por %p170, %p171
      %p174 = scmp.ne.s32.totalorder %s159, %s173
      %p175 = scmp.eq.s32.totalorder %s29, 0
      %p176 = por %p174, %p175
      %s178 = sadd.s32 %s177, 1
      %p181 = scmp.eq.s32.totalorder %s23, 1
      %p182 = scmp.ne.s32.totalorder %s177, %s179
      %p183 = scmp.eq.s32.totalorder %s23, 0
      %p184 = por %p182, %p183
      %p185 = scmp.ne.s32.totalorder %s177, %s179
      %p186 = scmp.eq.s32.totalorder %s28, 1
      %p187 = por %p185, %p186
      %p188 = scmp.ne.s32.totalorder %s179, %s180
      %p189 = scmp.eq.s32.totalorder %s28, 0
      %p190 = por %p188, %p189
      %p191 = scmp.ne.s32.totalorder %s179, %s180
      %p192 = scmp.eq.s32.totalorder %s29, 1
      %p193 = por %p191, %p192
      %p195 = scmp.ne.s32.totalorder %s180, %s194
      %p196 = scmp.eq.s32.totalorder %s29, 0
      %p197 = por %p195, %p196
      %s199 = sadd.s32 %s198, 1
      %p202 = scmp.eq.s32.totalorder %s23, 1
      %p203 = scmp.ne.s32.totalorder %s198, %s200
      %p204 = scmp.eq.s32.totalorder %s23, 0
      %p205 = por %p203, %p204
      %p206 = scmp.ne.s32.totalorder %s198, %s200
      %p207 = scmp.eq.s32.totalorder %s28, 1
      %p208 = por %p206, %p207
      %p209 = scmp.ne.s32.totalorder %s200, %s201
      %p210 = scmp.eq.s32.totalorder %s28, 0
      %p211 = por %p209, %p210
      %p212 = scmp.ne.s32.totalorder %s200, %s201
      %p213 = scmp.eq.s32.totalorder %s29, 1
      %p214 = por %p212, %p213
      %p216 = scmp.ne.s32.totalorder %s201, %s215
      %p217 = scmp.eq.s32.totalorder %s29, 0
      %p218 = por %p216, %p217
      %s220 = sadd.s32 %s219, 1
      %p223 = scmp.eq.s32.totalorder %s23, 1
      %p224 = scmp.ne.s32.totalorder %s219, %s221
      %p225 = scmp.eq.s32.totalorder %s23, 0
      %p226 = por %p224, %p225
      %p227 = scmp.ne.s32.totalorder %s219, %s221
      %p228 = scmp.eq.s32.totalorder %s28, 1
      %p229 = por %p227, %p228
      %p230 = scmp.ne.s32.totalorder %s221, %s222
      %p231 = scmp.eq.s32.totalorder %s28, 0
      %p232 = por %p230, %p231
      %p233 = scmp.ne.s32.totalorder %s221, %s222
      %p234 = scmp.eq.s32.totalorder %s29, 1
      %p235 = por %p233, %p234
      %p237 = scmp.ne.s32.totalorder %s222, %s236
      %p238 = scmp.eq.s32.totalorder %s29, 0
      %p239 = por %p237, %p238
      %s241 = sadd.s32 %s240, 1
      %p244 = scmp.eq.s32.totalorder %s23, 1
      %p245 = scmp.ne.s32.totalorder %s240, %s242
      %p246 = scmp.eq.s32.totalorder %s23, 0
      %p247 = por %p245, %p246
      %p248 = scmp.ne.s32.totalorder %s240, %s242
      %p249 = scmp.eq.s32.totalorder %s28, 1
      %p250 = por %p248, %p249
      %p251 = scmp.ne.s32.totalorder %s242, %s243
      %p252 = scmp.eq.s32.totalorder %s28, 0
      %p253 = por %p251, %p252
      %p254 = scmp.ne.s32.totalorder %s242, %s243
      %p255 = scmp.eq.s32.totalorder %s29, 1
      %p256 = por %p254, %p255
      %p258 = scmp.ne.s32.totalorder %s243, %s257
      %p259 = scmp.eq.s32.totalorder %s29, 0
      %p260 = por %p258, %p259
      %s262 = sadd.s32 %s261, 1
      %p265 = scmp.eq.s32.totalorder %s23, 1
      %p266 = scmp.ne.s32.totalorder %s261, %s263
      %p267 = scmp.eq.s32.totalorder %s23, 0
      %p268 = por %p266, %p267
      %p269 = scmp.ne.s32.totalorder %s261, %s263
      %p270 = scmp.eq.s32.totalorder %s28, 1
      %p271 = por %p269, %p270
      %p272 = scmp.ne.s32.totalorder %s263, %s264
      %p273 = scmp.eq.s32.totalorder %s28, 0
      %p274 = por %p272, %p273
      %p275 = scmp.ne.s32.totalorder %s263, %s264
      %p276 = scmp.eq.s32.totalorder %s29, 1
      %p277 = por %p275, %p276
      %p279 = scmp.ne.s32.totalorder %s264, %s278
      %p280 = scmp.eq.s32.totalorder %s29, 0
      %p281 = por %p279, %p280
      %s283 = sadd.s32 %s282, 1
      %p286 = scmp.eq.s32.totalorder %s23, 1
      %p287 = scmp.ne.s32.totalorder %s282, %s284
      %p288 = scmp.eq.s32.totalorder %s23, 0
      %p289 = por %p287, %p288
      %p290 = scmp.ne.s32.totalorder %s282, %s284
      %p291 = scmp.eq.s32.totalorder %s28, 1
      %p292 = por %p290, %p291
      %p293 = scmp.ne.s32.totalorder %s284, %s285
      %p294 = scmp.eq.s32.totalorder %s28, 0
      %p295 = por %p293, %p294
      %p296 = scmp.ne.s32.totalorder %s284, %s285
      %p297 = scmp.eq.s32.totalorder %s29, 1
      %p298 = por %p296, %p297
      %p300 = scmp.ne.s32.totalorder %s285, %s299
      %p301 = scmp.eq.s32.totalorder %s29, 0
      %p302 = por %p300, %p301
      %s304 = sadd.s32 %s303, 1
      %p307 = scmp.eq.s32.totalorder %s23, 1
      %p308 = scmp.ne.s32.totalorder %s303, %s305
      %p309 = scmp.eq.s32.totalorder %s23, 0
      %p310 = por %p308, %p309
      %p311 = scmp.ne.s32.totalorder %s303, %s305
      %p312 = scmp.eq.s32.totalorder %s28, 1
      %p313 = por %p311, %p312
      %p314 = scmp.ne.s32.totalorder %s305, %s306
      %p315 = scmp.eq.s32.totalorder %s28, 0
      %p316 = por %p314, %p315
      %p317 = scmp.ne.s32.totalorder %s305, %s306
      %p318 = scmp.eq.s32.totalorder %s29, 1
      %p319 = por %p317, %p318
      %p321 = scmp.ne.s32.totalorder %s306, %s320
      %p322 = scmp.eq.s32.totalorder %s29, 0
      %p323 = por %p321, %p322
      %s325 = sadd.s32 %s324, 1
      %p328 = scmp.eq.s32.totalorder %s23, 1
      %p329 = scmp.ne.s32.totalorder %s324, %s326
      %p330 = scmp.eq.s32.totalorder %s23, 0
      %p331 = por %p329, %p330
      %p332 = scmp.ne.s32.totalorder %s324, %s326
      %p333 = scmp.eq.s32.totalorder %s28, 1
      %p334 = por %p332, %p333
      %p335 = scmp.ne.s32.totalorder %s326, %s327
      %p336 = scmp.eq.s32.totalorder %s28, 0
      %p337 = por %p335, %p336
      %p338 = scmp.ne.s32.totalorder %s326, %s327
      %p339 = scmp.eq.s32.totalorder %s29, 1
      %p340 = por %p338, %p339
      %p342 = scmp.ne.s32.totalorder %s327, %s341
      %p343 = scmp.eq.s32.totalorder %s29, 0
      %p344 = por %p342, %p343
      %s345 = ssub.s32 %s23, %s30
      %p346 = scmp.eq.s32.totalorder %s345, 0
      %s348 = sadd.s32 %s347, 1
      %s349 = scalar_select %p346, %s347, %s348
      %p352 = pneg %p346
      %p353 = scmp.eq.s32.totalorder %s23, 1
      %p354 = por %p352, %p353
      %p355 = scmp.ne.s32.totalorder %s347, %s350
      %p356 = scmp.eq.s32.totalorder %s23, 0
      %p357 = por %p355, %p356
      %p358 = scmp.ne.s32.totalorder %s347, %s350
      %p359 = scmp.eq.s32.totalorder %s28, 1
      %p360 = por %p358, %p359
      %p361 = scmp.ne.s32.totalorder %s350, %s351
      %p362 = scmp.eq.s32.totalorder %s28, 0
      %p363 = por %p361, %p362
      %p364 = scmp.ne.s32.totalorder %s350, %s351
      %p365 = scmp.eq.s32.totalorder %s29, 1
      %p366 = por %p364, %p365
      %p368 = scmp.ne.s32.totalorder %s351, %s367
      %p369 = scmp.eq.s32.totalorder %s29, 0
      %p370 = por %p368, %p369
      %p371 = scmp.le.s32.totalorder 1, %s23
      %p372 = scmp.lt.s32.totalorder %s23, 3
      %p373 = pnand %p371, %p372
      %p374 = pneg %p373
      // Predicated region
      $region9: #{tpu_custom_call.1} parent=5 // pred_check
        _
      $region10: #{tpu_custom_call.1} parent=5 // pred_check_branch
        %376 = sbr.rel (%p373) target = $region12
      $region11: #{tpu_custom_call.1} parent=5 // pred_region
        %s377 = ssub.s32 %s23, 1
        // Predicated region
        $region13: #{tpu_custom_call.1} parent=11 // pred_check
          %p378 = pneg %p148
        $region14: #{tpu_custom_call.1} parent=11 // pred_check_branch
          %380 = sbr.rel (%p378) target = $region16
        $region15: #{tpu_custom_call.1} parent=11 // pred_region
          _
        $region16: #{tpu_custom_call.1} parent=11 // pred_fallthru
          _
        // Predicated region
        $region17: #{tpu_custom_call.1} parent=11 // pred_check
          %p381 = pneg %p169
        $region18: #{tpu_custom_call.1} parent=11 // pred_check_branch
          %383 = sbr.rel (%p381) target = $region20
        $region19: #{tpu_custom_call.1} parent=11 // pred_region
          _
        $region20: #{tpu_custom_call.1} parent=11 // pred_fallthru
          _
        // Predicated region
        $region21: #{tpu_custom_call.1} parent=11 // pred_check
          %p384 = pneg %p190
        $region22: #{tpu_custom_call.1} parent=11 // pred_check_branch
          %386 = sbr.rel (%p384) target = $region24
        $region23: #{tpu_custom_call.1} parent=11 // pred_region
          _
        $region24: #{tpu_custom_call.1} parent=11 // pred_fallthru
          _
        // Predicated region
        $region25: #{tpu_custom_call.1} parent=11 // pred_check
          %p387 = pneg %p211
        $region26: #{tpu_custom_call.1} parent=11 // pred_check_branch
          %389 = sbr.rel (%p387) target = $region28
        $region27: #{tpu_custom_call.1} parent=11 // pred_region
          _
        $region28: #{tpu_custom_call.1} parent=11 // pred_fallthru
          _
        // Predicated region
        $region29: #{tpu_custom_call.1} parent=11 // pred_check
          %p390 = pneg %p232
        $region30: #{tpu_custom_call.1} parent=11 // pred_check_branch
          %392 = sbr.rel (%p390) target = $region32
        $region31: #{tpu_custom_call.1} parent=11 // pred_region
          _
        $region32: #{tpu_custom_call.1} parent=11 // pred_fallthru
          _
        // Predicated region
        $region33: #{tpu_custom_call.1} parent=11 // pred_check
          %p393 = pneg %p253
        $region34: #{tpu_custom_call.1} parent=11 // pred_check_branch
          %395 = sbr.rel (%p393) target = $region36
        $region35: #{tpu_custom_call.1} parent=11 // pred_region
          _
        $region36: #{tpu_custom_call.1} parent=11 // pred_fallthru
          _
        // Predicated region
        $region37: #{tpu_custom_call.1} parent=11 // pred_check
          %p396 = pneg %p274
        $region38: #{tpu_custom_call.1} parent=11 // pred_check_branch
          %398 = sbr.rel (%p396) target = $region40
        $region39: #{tpu_custom_call.1} parent=11 // pred_region
          _
        $region40: #{tpu_custom_call.1} parent=11 // pred_fallthru
          _
        // Predicated region
        $region41: #{tpu_custom_call.1} parent=11 // pred_check
          %p399 = pneg %p295
        $region42: #{tpu_custom_call.1} parent=11 // pred_check_branch
          %401 = sbr.rel (%p399) target = $region44
        $region43: #{tpu_custom_call.1} parent=11 // pred_region
          _
        $region44: #{tpu_custom_call.1} parent=11 // pred_fallthru
          _
        // Predicated region
        $region45: #{tpu_custom_call.1} parent=11 // pred_check
          %p402 = pneg %p316
        $region46: #{tpu_custom_call.1} parent=11 // pred_check_branch
          %404 = sbr.rel (%p402) target = $region48
        $region47: #{tpu_custom_call.1} parent=11 // pred_region
          _
        $region48: #{tpu_custom_call.1} parent=11 // pred_fallthru
          _
        // Predicated region
        $region49: #{tpu_custom_call.1} parent=11 // pred_check
          %p405 = pneg %p337
        $region50: #{tpu_custom_call.1} parent=11 // pred_check_branch
          %407 = sbr.rel (%p405) target = $region52
        $region51: #{tpu_custom_call.1} parent=11 // pred_region
          _
        $region52: #{tpu_custom_call.1} parent=11 // pred_fallthru
          _
      $region12: #{tpu_custom_call.1} parent=5 // pred_fallthru
        _
      %p408 = scmp.lt.s32.totalorder %s23, 2
      // Predicated region
      $region53: #{tpu_custom_call.1} parent=5 // pred_check
        %p409 = pneg %p408
      $region54: #{tpu_custom_call.1} parent=5 // pred_check_branch
        %411 = sbr.rel (%p409) target = $region56
      $region55: #{tpu_custom_call.1} parent=5 // pred_region
        // Predicated region
        $region57: #{tpu_custom_call.1} parent=55 // pred_check
          %p412 = pneg %p43
        $region58: #{tpu_custom_call.1} parent=55 // pred_check_branch
          %414 = sbr.rel (%p412) target = $region60
        $region59: #{tpu_custom_call.1} parent=55 // pred_region
          %p415 = scmp.lt.s32.totalorder %s23, 1
          %s416 = scalar_select %p415, %s23, 1
          %s417 = smul.addr %s416, 8
          %s418 = smul.addr %s417, 8
          %s419 = scalar_lea.vmem %s0, %s418
        $region60: #{tpu_custom_call.1} parent=55 // pred_fallthru
          _
        // Predicated region
        $region61: #{tpu_custom_call.1} parent=55 // pred_check
          %p420 = pneg %p69
        $region62: #{tpu_custom_call.1} parent=55 // pred_check_branch
          %422 = sbr.rel (%p420) target = $region64
        $region63: #{tpu_custom_call.1} parent=55 // pred_region
          %p423 = scmp.lt.s32.totalorder %s23, 1
          %s424 = scalar_select %p423, %s23, 1
          %s425 = smul.addr %s424, 16
          %s426 = smul.addr %s425, 8
          %s427 = scalar_lea.vmem %s1, %s426
        $region64: #{tpu_custom_call.1} parent=55 // pred_fallthru
          _
        // Predicated region
        $region65: #{tpu_custom_call.1} parent=55 // pred_check
          %p428 = pneg %p95
        $region66: #{tpu_custom_call.1} parent=55 // pred_check_branch
          %430 = sbr.rel (%p428) target = $region68
        $region67: #{tpu_custom_call.1} parent=55 // pred_region
          %p431 = scmp.lt.s32.totalorder %s23, 1
          %s432 = scalar_select %p431, %s23, 1
          %s433 = scalar_lea.vmem %s2, %s432
        $region68: #{tpu_custom_call.1} parent=55 // pred_fallthru
          _
        // Predicated region
        $region69: #{tpu_custom_call.1} parent=55 // pred_check
          %p434 = pneg %p121
        $region70: #{tpu_custom_call.1} parent=55 // pred_check_branch
          %436 = sbr.rel (%p434) target = $region72
        $region71: #{tpu_custom_call.1} parent=55 // pred_region
          %p437 = scmp.lt.s32.totalorder %s23, 1
          %s438 = scalar_select %p437, %s23, 1
          %s439 = smul.addr %s438, 16
          %s440 = smul.addr %s439, 8
          %s441 = scalar_lea.vmem %s3, %s440
        $region72: #{tpu_custom_call.1} parent=55 // pred_fallthru
          _
      $region56: #{tpu_custom_call.1} parent=5 // pred_fallthru
        _
      %p442 = scmp.le.s32.totalorder 1, %s23
      %p443 = scmp.lt.s32.totalorder %s23, 3
      %p444 = pnand %p442, %p443
      %p445 = pneg %p444
      // Predicated region
      $region73: #{tpu_custom_call.1} parent=5 // pred_check
        _
      $region74: #{tpu_custom_call.1} parent=5 // pred_check_branch
        %447 = sbr.rel (%p444) target = $region76
      $region75: #{tpu_custom_call.1} parent=5 // pred_region
        %s448 = ssub.s32 %s23, 1
        %p449 = scmp.lt.s32.totalorder %s28, 1
        %s450 = scalar_select %p449, %s28, 1
        %s451 = smul.addr %s450, 8
        %s452 = smul.addr %s451, 8
        %s453 = scalar_lea.vmem %s0, %s452
        %p454 = pneg %p49
        %p455 = pneg %p46
        %p456 = scmp.lt.s32.totalorder %s28, 1
        %s457 = scalar_select %p456, %s28, 1
        %s458 = smul.addr %s457, 16
        %s459 = smul.addr %s458, 8
        %s460 = scalar_lea.vmem %s1, %s459
        %p461 = pneg %p75
        %p462 = pneg %p72
        %p463 = scmp.lt.s32.totalorder %s28, 1
        %s464 = scalar_select %p463, %s28, 1
        %s465 = scalar_lea.vmem %s2, %s464
        %p466 = pneg %p101
        %p467 = pneg %p98
        %p468 = scmp.lt.s32.totalorder %s28, 1
        %s469 = scalar_select %p468, %s28, 1
        %s470 = smul.addr %s469, 16
        %s471 = smul.addr %s470, 8
        %s472 = scalar_lea.vmem %s3, %s471
        %p473 = pneg %p127
        %p474 = pneg %p124
        %p475 = pneg %p148
        %p476 = pneg %p145
        %p477 = pneg %p169
        %p478 = pneg %p166
        %p479 = pneg %p190
        %p480 = pneg %p187
        %p481 = pneg %p211
        %p482 = pneg %p208
        %p483 = pneg %p232
        %p484 = pneg %p229
        %p485 = pneg %p253
        %p486 = pneg %p250
        %p487 = pneg %p274
        %p488 = pneg %p271
        %p489 = pneg %p295
        %p490 = pneg %p292
        %p491 = pneg %p316
        %p492 = pneg %p313
        %p493 = pneg %p337
        %p494 = pneg %p334
        %p495 = pneg %p363
        %p496 = pneg %p360
        %s497 = sand.u32 %s350, 1
        %s498 = scalar_lea.sflag [#allocation3], %s497
        %s499 = sand.u32 %s350, 1
        %s500 = smul.addr %s499, 64
        %s501 = scalar_lea.vmem [#allocation2], %s500
        %p502 = scmp.lt.s32.totalorder %s28, 1
        %s503 = scalar_select %p502, %s28, 1
        %s504 = smul.addr %s503, 8
        %s505 = smul.addr %s504, 8
        %s506 = scalar_lea.vmem %s0, %s505
        %p507 = scmp.lt.s32.totalorder %s28, 1
        %s508 = scalar_select %p507, %s28, 1
        %s509 = smul.addr %s508, 16
        %s510 = smul.addr %s509, 8
        %s511 = scalar_lea.vmem %s1, %s510
        %p512 = scmp.lt.s32.totalorder %s28, 1
        %s513 = scalar_select %p512, %s28, 1
        %s514 = scalar_lea.vmem %s2, %s513
        %p515 = scmp.lt.s32.totalorder %s28, 1
        %s516 = scalar_select %p515, %s28, 1
        %s517 = smul.addr %s516, 16
        %s518 = smul.addr %s517, 8
        %s519 = scalar_lea.vmem %s3, %s518
        %v520 = vld [vmem:[%s506] sm:$0xff]
        %v521 = vld [vmem:[%s506 + $0x8] sm:$0xff]
        %v522 = vld [vmem:[%s506 + $0x10] sm:$0xff]
        %v523 = vld [vmem:[%s506 + $0x18] sm:$0xff]
        %v524 = vld [vmem:[%s506 + $0x20] sm:$0xff]
        %v525 = vld [vmem:[%s506 + $0x28] sm:$0xff]
        %v526 = vld [vmem:[%s506 + $0x30] sm:$0xff]
        %v527 = vld [vmem:[%s506 + $0x38] sm:$0xff]
        %v528 = vld [vmem:[%s511] sm:$0xff]
        %v529 = vld [vmem:[%s511 + $0x8] sm:$0xff]
        %v530 = vld [vmem:[%s511 + $0x10] sm:$0xff]
        %v531 = vld [vmem:[%s511 + $0x18] sm:$0xff]
        %v532 = vld [vmem:[%s511 + $0x20] sm:$0xff]
        %v533 = vld [vmem:[%s511 + $0x28] sm:$0xff]
        %v534 = vld [vmem:[%s511 + $0x30] sm:$0xff]
        %v535 = vld [vmem:[%s511 + $0x38] sm:$0xff]
        %v536 = vld [vmem:[%s511 + $0x40] sm:$0xff]
        %v537 = vld [vmem:[%s511 + $0x48] sm:$0xff]
        %v538 = vld [vmem:[%s511 + $0x50] sm:$0xff]
        %v539 = vld [vmem:[%s511 + $0x58] sm:$0xff]
        %v540 = vld [vmem:[%s511 + $0x60] sm:$0xff]
        %v541 = vld [vmem:[%s511 + $0x68] sm:$0xff]
        %v542 = vld [vmem:[%s511 + $0x70] sm:$0xff]
        %v543 = vld [vmem:[%s511 + $0x78] sm:$0xff]
        %v544 = vlaneseq
        %v545 = vand.u32 %v544, 127
        %546 = vset.pattern.permute.xlu0 0
        %547 = vperm.xlu0 %546, %v528
        %v548 = vpop.permute.xlu0 %547
        %549 = vset.pattern.permute.xlu0 0
        %550 = vperm.xlu0 %549, %v529
        %v551 = vpop.permute.xlu0 %550
        %552 = vset.pattern.permute.xlu0 0
        %553 = vperm.xlu0 %552, %v530
        %v554 = vpop.permute.xlu0 %553
        %555 = vset.pattern.permute.xlu0 0
        %556 = vperm.xlu0 %555, %v531
        %v557 = vpop.permute.xlu0 %556
        %558 = vset.pattern.permute.xlu0 0
        %559 = vperm.xlu0 %558, %v532
        %v560 = vpop.permute.xlu0 %559
        %561 = vset.pattern.permute.xlu0 0
        %562 = vperm.xlu0 %561, %v533
        %v563 = vpop.permute.xlu0 %562
        %564 = vset.pattern.permute.xlu0 0
        %565 = vperm.xlu0 %564, %v534
        %v566 = vpop.permute.xlu0 %565
        %567 = vset.pattern.permute.xlu0 0
        %568 = vperm.xlu0 %567, %v535
        %v569 = vpop.permute.xlu0 %568
        %570 = vset.pattern.permute.xlu0 0
        %571 = vperm.xlu0 %570, %v536
        %v572 = vpop.permute.xlu0 %571
        %573 = vset.pattern.permute.xlu0 0
        %574 = vperm.xlu0 %573, %v537
        %v575 = vpop.permute.xlu0 %574
        %576 = vset.pattern.permute.xlu0 0
        %577 = vperm.xlu0 %576, %v538
        %v578 = vpop.permute.xlu0 %577
        %579 = vset.pattern.permute.xlu0 0
        %580 = vperm.xlu0 %579, %v539
        %v581 = vpop.permute.xlu0 %580
        %582 = vset.pattern.permute.xlu0 0
        %583 = vperm.xlu0 %582, %v540
        %v584 = vpop.permute.xlu0 %583
        %585 = vset.pattern.permute.xlu0 0
        %586 = vperm.xlu0 %585, %v541
        %v587 = vpop.permute.xlu0 %586
        %588 = vset.pattern.permute.xlu0 0
        %589 = vperm.xlu0 %588, %v542
        %v590 = vpop.permute.xlu0 %589
        %591 = vset.pattern.permute.xlu0 0
        %592 = vperm.xlu0 %591, %v543
        %v593 = vpop.permute.xlu0 %592
        %vm594 = vcmp.eq.s32.totalorder %v545, %v548
        %vm595 = vcmp.eq.s32.totalorder %v545, %v551
        %vm596 = vcmp.eq.s32.totalorder %v545, %v554
        %vm597 = vcmp.eq.s32.totalorder %v545, %v557
        %vm598 = vcmp.eq.s32.totalorder %v545, %v560
        %vm599 = vcmp.eq.s32.totalorder %v545, %v563
        %vm600 = vcmp.eq.s32.totalorder %v545, %v566
        %vm601 = vcmp.eq.s32.totalorder %v545, %v569
        %vm602 = vcmp.eq.s32.totalorder %v545, %v572
        %vm603 = vcmp.eq.s32.totalorder %v545, %v575
        %vm604 = vcmp.eq.s32.totalorder %v545, %v578
        %vm605 = vcmp.eq.s32.totalorder %v545, %v581
        %vm606 = vcmp.eq.s32.totalorder %v545, %v584
        %vm607 = vcmp.eq.s32.totalorder %v545, %v587
        %vm608 = vcmp.eq.s32.totalorder %v545, %v590
        %vm609 = vcmp.eq.s32.totalorder %v545, %v593
        %v610 = vsel %vm594, 1, 0
        %v611 = vsel %vm595, 1, 0
        %v612 = vsel %vm596, 1, 0
        %v613 = vsel %vm597, 1, 0
        %v614 = vsel %vm598, 1, 0
        %v615 = vsel %vm599, 1, 0
        %v616 = vsel %vm600, 1, 0
        %v617 = vsel %vm601, 1, 0
        %v618 = vsel %vm602, 1, 0
        %v619 = vsel %vm603, 1, 0
        %v620 = vsel %vm604, 1, 0
        %v621 = vsel %vm605, 1, 0
        %v622 = vsel %vm606, 1, 0
        %v623 = vsel %vm607, 1, 0
        %v624 = vsel %vm608, 1, 0
        %v625 = vsel %vm609, 1, 0
        %v626 = vcvt.s32.f32 %v610
        %v627 = vcvt.s32.f32 %v611
        %v628 = vcvt.s32.f32 %v612
        %v629 = vcvt.s32.f32 %v613
        %v630 = vcvt.s32.f32 %v614
        %v631 = vcvt.s32.f32 %v615
        %v632 = vcvt.s32.f32 %v616
        %v633 = vcvt.s32.f32 %v617
        %v634 = vcvt.s32.f32 %v618
        %v635 = vcvt.s32.f32 %v619
        %v636 = vcvt.s32.f32 %v620
        %v637 = vcvt.s32.f32 %v621
        %v638 = vcvt.s32.f32 %v622
        %v639 = vcvt.s32.f32 %v623
        %v640 = vcvt.s32.f32 %v624
        %v641 = vcvt.s32.f32 %v625
        %642 = vset.pattern.permute.xlu0 1
        %643 = vperm.xlu0 %642, %v528
        %v644 = vpop.permute.xlu0 %643
        %645 = vset.pattern.permute.xlu0 1
        %646 = vperm.xlu0 %645, %v529
        %v647 = vpop.permute.xlu0 %646
        %648 = vset.pattern.permute.xlu0 1
        %649 = vperm.xlu0 %648, %v530
        %v650 = vpop.permute.xlu0 %649
        %651 = vset.pattern.permute.xlu0 1
        %652 = vperm.xlu0 %651, %v531
        %v653 = vpop.permute.xlu0 %652
        %654 = vset.pattern.permute.xlu0 1
        %655 = vperm.xlu0 %654, %v532
        %v656 = vpop.permute.xlu0 %655
        %657 = vset.pattern.permute.xlu0 1
        %658 = vperm.xlu0 %657, %v533
        %v659 = vpop.permute.xlu0 %658
        %660 = vset.pattern.permute.xlu0 1
        %661 = vperm.xlu0 %660, %v534
        %v662 = vpop.permute.xlu0 %661
        %663 = vset.pattern.permute.xlu0 1
        %664 = vperm.xlu0 %663, %v535
        %v665 = vpop.permute.xlu0 %664
        %666 = vset.pattern.permute.xlu0 1
        %667 = vperm.xlu0 %666, %v536
        %v668 = vpop.permute.xlu0 %667
        %669 = vset.pattern.permute.xlu0 1
        %670 = vperm.xlu0 %669, %v537
        %v671 = vpop.permute.xlu0 %670
        %672 = vset.pattern.permute.xlu0 1
        %673 = vperm.xlu0 %672, %v538
        %v674 = vpop.permute.xlu0 %673
        %675 = vset.pattern.permute.xlu0 1
        %676 = vperm.xlu0 %675, %v539
        %v677 = vpop.permute.xlu0 %676
        %678 = vset.pattern.permute.xlu0 1
        %679 = vperm.xlu0 %678, %v540
        %v680 = vpop.permute.xlu0 %679
        %681 = vset.pattern.permute.xlu0 1
        %682 = vperm.xlu0 %681, %v541
        %v683 = vpop.permute.xlu0 %682
        %684 = vset.pattern.permute.xlu0 1
        %685 = vperm.xlu0 %684, %v542
        %v686 = vpop.permute.xlu0 %685
        %687 = vset.pattern.permute.xlu0 1
        %688 = vperm.xlu0 %687, %v543
        %v689 = vpop.permute.xlu0 %688
        %vm690 = vcmp.eq.s32.totalorder %v545, %v644
        %vm691 = vcmp.eq.s32.totalorder %v545, %v647
        %vm692 = vcmp.eq.s32.totalorder %v545, %v650
        %vm693 = vcmp.eq.s32.totalorder %v545, %v653
        %vm694 = vcmp.eq.s32.totalorder %v545, %v656
        %vm695 = vcmp.eq.s32.totalorder %v545, %v659
        %vm696 = vcmp.eq.s32.totalorder %v545, %v662
        %vm697 = vcmp.eq.s32.totalorder %v545, %v665
        %vm698 = vcmp.eq.s32.totalorder %v545, %v668
        %vm699 = vcmp.eq.s32.totalorder %v545, %v671
        %vm700 = vcmp.eq.s32.totalorder %v545, %v674
        %vm701 = vcmp.eq.s32.totalorder %v545, %v677
        %vm702 = vcmp.eq.s32.totalorder %v545, %v680
        %vm703 = vcmp.eq.s32.totalorder %v545, %v683
        %vm704 = vcmp.eq.s32.totalorder %v545, %v686
        %vm705 = vcmp.eq.s32.totalorder %v545, %v689
        %v706 = vsel %vm690, 1, 0
        %v707 = vsel %vm691, 1, 0
        %v708 = vsel %vm692, 1, 0
        %v709 = vsel %vm693, 1, 0
        %v710 = vsel %vm694, 1, 0
        %v711 = vsel %vm695, 1, 0
        %v712 = vsel %vm696, 1, 0
        %v713 = vsel %vm697, 1, 0
        %v714 = vsel %vm698, 1, 0
        %v715 = vsel %vm699, 1, 0
        %v716 = vsel %vm700, 1, 0
        %v717 = vsel %vm701, 1, 0
        %v718 = vsel %vm702, 1, 0
        %v719 = vsel %vm703, 1, 0
        %v720 = vsel %vm704, 1, 0
        %v721 = vsel %vm705, 1, 0
        %v722 = vcvt.s32.f32 %v706
        %v723 = vcvt.s32.f32 %v707
        %v724 = vcvt.s32.f32 %v708
        %v725 = vcvt.s32.f32 %v709
        %v726 = vcvt.s32.f32 %v710
        %v727 = vcvt.s32.f32 %v711
        %v728 = vcvt.s32.f32 %v712
        %v729 = vcvt.s32.f32 %v713
        %v730 = vcvt.s32.f32 %v714
        %v731 = vcvt.s32.f32 %v715
        %v732 = vcvt.s32.f32 %v716
        %v733 = vcvt.s32.f32 %v717
        %v734 = vcvt.s32.f32 %v718
        %v735 = vcvt.s32.f32 %v719
        %v736 = vcvt.s32.f32 %v720
        %v737 = vcvt.s32.f32 %v721
        %v738 = vlaneseq
        %v739 = vshrl.u32 %v738, 7
        %v740 = vadd.s32 %v739, 8
        %v741 = vadd.s32 %v739, 16
        %v742 = vadd.s32 %v739, 24
        %v743 = vadd.s32 %v739, 32
        %v744 = vadd.s32 %v739, 40
        %v745 = vadd.s32 %v739, 48
        %v746 = vadd.s32 %v739, 56
        %v747 = vld [vmem:[%s514] sm:$0x1]
        %v748 = vlaneseq
        %v749 = vshrl.u32 %v748, 7
        %v750 = vsub.s32 0, %v749
        %v751 = vrot.slane %v747, %v750
        %vm752 = vcmp.eq.s32.totalorder %v739, %v751
        %vm753 = vcmp.eq.s32.totalorder %v740, %v751
        %vm754 = vcmp.eq.s32.totalorder %v741, %v751
        %vm755 = vcmp.eq.s32.totalorder %v742, %v751
        %vm756 = vcmp.eq.s32.totalorder %v743, %v751
        %vm757 = vcmp.eq.s32.totalorder %v744, %v751
        %vm758 = vcmp.eq.s32.totalorder %v745, %v751
        %vm759 = vcmp.eq.s32.totalorder %v746, %v751
        %v760 = vsel %vm752, 1, 0
        %v761 = vsel %vm753, 1, 0
        %v762 = vsel %vm754, 1, 0
        %v763 = vsel %vm755, 1, 0
        %v764 = vsel %vm756, 1, 0
        %v765 = vsel %vm757, 1, 0
        %v766 = vsel %vm758, 1, 0
        %v767 = vsel %vm759, 1, 0
        %v768 = vcvt.s32.f32 %v760
        %v769 = vcvt.s32.f32 %v761
        %v770 = vcvt.s32.f32 %v762
        %v771 = vcvt.s32.f32 %v763
        %v772 = vcvt.s32.f32 %v764
        %v773 = vcvt.s32.f32 %v765
        %v774 = vcvt.s32.f32 %v766
        %v775 = vcvt.s32.f32 %v767
        %vm776 = vcmask 523264
        %v778 = vsel %vm776, %v626, 0
        %v781 = vsel %vm776, %v627, 0
        %v784 = vsel %vm776, %v628, 0
        %v787 = vsel %vm776, %v629, 0
        %v790 = vsel %vm776, %v630, 0
        %v793 = vsel %vm776, %v631, 0
        %v796 = vsel %vm776, %v632, 0
        %v799 = vsel %vm776, %v633, 0
        %v802 = vsel %vm776, %v634, 0
        %v805 = vsel %vm776, %v635, 0
        %v808 = vsel %vm776, %v636, 0
        %v811 = vsel %vm776, %v637, 0
        %v814 = vsel %vm776, %v638, 0
        %v817 = vsel %vm776, %v639, 0
        %v820 = vsel %vm776, %v640, 0
        %v823 = vsel %vm776, %v641, 0
        %825 = vmatprep.subr.mxu0 0.0
        %826 = vmatpush1.msra.mxu0 0.0
        %827 = vmatprep.subr.mxu0 0.0
        %828 = vmatpush1.msra.mxu0 0.0
        %829 = vmatprep.subr.mxu0 0.0
        %830 = vmatpush1.msra.mxu0 0.0
        %831 = vmatprep.subr.mxu0 0.0
        %832 = vmatpush1.msra.mxu0 0.0
        %833 = vmatprep.subr.mxu0 0.0
        %834 = vmatpush1.msra.mxu0 0.0
        %835 = vmatprep.subr.mxu0 0.0
        %836 = vmatpush1.msra.mxu0 0.0
        %837 = vmatprep.subr.mxu0 0.0
        %838 = vmatpush1.msra.mxu0 0.0
        %839 = vmatprep.subr.mxu0 0.0
        %840 = vmatpush1.msra.mxu0 0.0
        %841 = vmatprep.subr.mxu0 0.0
        %842 = vmatpush1.msra.mxu0 %v527
        %843 = vmatprep.subr.mxu0 0.0
        %844 = vmatpush1.msra.mxu0 %v526
        %845 = vmatprep.subr.mxu0 0.0
        %846 = vmatpush1.msra.mxu0 %v525
        %847 = vmatprep.subr.mxu0 0.0
        %848 = vmatpush1.msra.mxu0 %v524
        %849 = vmatprep.subr.mxu0 0.0
        %850 = vmatpush1.msra.mxu0 %v523
        %851 = vmatprep.subr.mxu0 0.0
        %852 = vmatpush1.msra.mxu0 %v522
        %853 = vmatprep.subr.mxu0 0.0
        %854 = vmatpush1.msra.mxu0 %v521
        %855 = vmatprep.subr.mxu0 0.0
        %856 = vmatpush1.msra.mxu0 %v520
        %857 = vmatprep.subr.mxu0 0.0
        %858 = vmatpush2.msra.mxu0 0.0
        %859 = vmatprep.subr.mxu0 0.0
        %860 = vmatpush2.msra.mxu0 0.0
        %861 = vmatprep.subr.mxu0 0.0
        %862 = vmatpush2.msra.mxu0 0.0
        %863 = vmatprep.subr.mxu0 0.0
        %864 = vmatpush2.msra.mxu0 0.0
        %865 = vmatprep.subr.mxu0 0.0
        %866 = vmatpush2.msra.mxu0 0.0
        %867 = vmatprep.subr.mxu0 0.0
        %868 = vmatpush2.msra.mxu0 0.0
        %869 = vmatprep.subr.mxu0 0.0
        %870 = vmatpush2.msra.mxu0 0.0
        %871 = vmatprep.subr.mxu0 0.0
        %872 = vmatpush2.msra.mxu0 0.0
        %873 = vmatprep.subr.mxu0 0.0
        %874 = vmatpush2.msra.mxu0 0.0
        %875 = vmatprep.subr.mxu0 0.0
        %876 = vmatpush2.msra.mxu0 0.0
        %877 = vmatprep.subr.mxu0 0.0
        %878 = vmatpush2.msra.mxu0 0.0
        %879 = vmatprep.subr.mxu0 0.0
        %880 = vmatpush2.msra.mxu0 0.0
        %881 = vmatprep.subr.mxu0 0.0
        %882 = vmatpush2.msra.mxu0 0.0
        %883 = vmatprep.subr.mxu0 0.0
        %884 = vmatpush2.msra.mxu0 0.0
        %885 = vmatprep.subr.mxu0 0.0
        %886 = vmatpush2.msra.mxu0 0.0
        %887 = vmatprep.subr.mxu0 0.0
        %888 = vmatpush2.msra.mxu0 0.0
        %889 = vmatprep.mubr.f32.mxu0 0.0
        %890 = vmatmul.mubr.f32.gmra.mxu0 %v778
        %v891 = vpop.f32.mrf.mxu0
        %v892 = vadd.f32 0.0, %v891
        %v893 = vpop.f32.mrf.mxu0
        %894 = vmatprep.mubr.f32.mxu0 0.0
        %895 = vmatmul.mubr.f32.gmra.mxu0 %v781
        %v896 = vpop.f32.mrf.mxu0
        %v897 = vadd.f32 0.0, %v896
        %v898 = vpop.f32.mrf.mxu0
        %899 = vmatprep.mubr.f32.mxu0 0.0
        %900 = vmatmul.mubr.f32.gmra.mxu0 %v784
        %v901 = vpop.f32.mrf.mxu0
        %v902 = vadd.f32 0.0, %v901
        %v903 = vpop.f32.mrf.mxu0
        %904 = vmatprep.mubr.f32.mxu0 0.0
        %905 = vmatmul.mubr.f32.gmra.mxu0 %v787
        %v906 = vpop.f32.mrf.mxu0
        %v907 = vadd.f32 0.0, %v906
        %v908 = vpop.f32.mrf.mxu0
        %909 = vmatprep.mubr.f32.mxu0 0.0
        %910 = vmatmul.mubr.f32.gmra.mxu0 %v790
        %v911 = vpop.f32.mrf.mxu0
        %v912 = vadd.f32 0.0, %v911
        %v913 = vpop.f32.mrf.mxu0
        %914 = vmatprep.mubr.f32.mxu0 0.0
        %915 = vmatmul.mubr.f32.gmra.mxu0 %v793
        %v916 = vpop.f32.mrf.mxu0
        %v917 = vadd.f32 0.0, %v916
        %v918 = vpop.f32.mrf.mxu0
        %919 = vmatprep.mubr.f32.mxu0 0.0
        %920 = vmatmul.mubr.f32.gmra.mxu0 %v796
        %v921 = vpop.f32.mrf.mxu0
        %v922 = vadd.f32 0.0, %v921
        %v923 = vpop.f32.mrf.mxu0
        %924 = vmatprep.mubr.f32.mxu0 0.0
        %925 = vmatmul.mubr.f32.gmra.mxu0 %v799
        %v926 = vpop.f32.mrf.mxu0
        %v927 = vadd.f32 0.0, %v926
        %v928 = vpop.f32.mrf.mxu0
        %929 = vmatprep.mubr.f32.mxu0 0.0
        %930 = vmatmul.mubr.f32.gmra.mxu0 %v802
        %v931 = vpop.f32.mrf.mxu0
        %v932 = vadd.f32 0.0, %v931
        %v933 = vpop.f32.mrf.mxu0
        %934 = vmatprep.mubr.f32.mxu0 0.0
        %935 = vmatmul.mubr.f32.gmra.mxu0 %v805
        %v936 = vpop.f32.mrf.mxu0
        %v937 = vadd.f32 0.0, %v936
        %v938 = vpop.f32.mrf.mxu0
        %939 = vmatprep.mubr.f32.mxu0 0.0
        %940 = vmatmul.mubr.f32.gmra.mxu0 %v808
        %v941 = vpop.f32.mrf.mxu0
        %v942 = vadd.f32 0.0, %v941
        %v943 = vpop.f32.mrf.mxu0
        %944 = vmatprep.mubr.f32.mxu0 0.0
        %945 = vmatmul.mubr.f32.gmra.mxu0 %v811
        %v946 = vpop.f32.mrf.mxu0
        %v947 = vadd.f32 0.0, %v946
        %v948 = vpop.f32.mrf.mxu0
        %949 = vmatprep.mubr.f32.mxu0 0.0
        %950 = vmatmul.mubr.f32.gmra.mxu0 %v814
        %v951 = vpop.f32.mrf.mxu0
        %v952 = vadd.f32 0.0, %v951
        %v953 = vpop.f32.mrf.mxu0
        %954 = vmatprep.mubr.f32.mxu0 0.0
        %955 = vmatmul.mubr.f32.gmra.mxu0 %v817
        %v956 = vpop.f32.mrf.mxu0
        %v957 = vadd.f32 0.0, %v956
        %v958 = vpop.f32.mrf.mxu0
        %959 = vmatprep.mubr.f32.mxu0 0.0
        %960 = vmatmul.mubr.f32.gmra.mxu0 %v820
        %v961 = vpop.f32.mrf.mxu0
        %v962 = vadd.f32 0.0, %v961
        %v963 = vpop.f32.mrf.mxu0
        %964 = vmatprep.mubr.f32.mxu0 0.0
        %965 = vmatmul.mubr.f32.gmra.mxu0 %v823
        %v966 = vpop.f32.mrf.mxu0
        %v967 = vadd.f32 0.0, %v966
        %v968 = vpop.f32.mrf.mxu0
        %969 = vdwg.mxu0
        %v971 = vsel %vm776, %v722, 0
        %v974 = vsel %vm776, %v723, 0
        %v977 = vsel %vm776, %v724, 0
        %v980 = vsel %vm776, %v725, 0
        %v983 = vsel %vm776, %v726, 0
        %v986 = vsel %vm776, %v727, 0
        %v989 = vsel %vm776, %v728, 0
        %v992 = vsel %vm776, %v729, 0
        %v995 = vsel %vm776, %v730, 0
        %v998 = vsel %vm776, %v731, 0
        %v1001 = vsel %vm776, %v732, 0
        %v1004 = vsel %vm776, %v733, 0
        %v1007 = vsel %vm776, %v734, 0
        %v1010 = vsel %vm776, %v735, 0
        %v1013 = vsel %vm776, %v736, 0
        %v1016 = vsel %vm776, %v737, 0
        %1018 = vmatprep.subr.mxu0 0.0
        %1019 = vmatpush1.msra.mxu0 0.0
        %1020 = vmatprep.subr.mxu0 0.0
        %1021 = vmatpush1.msra.mxu0 0.0
        %1022 = vmatprep.subr.mxu0 0.0
        %1023 = vmatpush1.msra.mxu0 0.0
        %1024 = vmatprep.subr.mxu0 0.0
        %1025 = vmatpush1.msra.mxu0 0.0
        %1026 = vmatprep.subr.mxu0 0.0
        %1027 = vmatpush1.msra.mxu0 0.0
        %1028 = vmatprep.subr.mxu0 0.0
        %1029 = vmatpush1.msra.mxu0 0.0
        %1030 = vmatprep.subr.mxu0 0.0
        %1031 = vmatpush1.msra.mxu0 0.0
        %1032 = vmatprep.subr.mxu0 0.0
        %1033 = vmatpush1.msra.mxu0 0.0
        %1034 = vmatprep.subr.mxu0 0.0
        %1035 = vmatpush1.msra.mxu0 %v527
        %1036 = vmatprep.subr.mxu0 0.0
        %1037 = vmatpush1.msra.mxu0 %v526
        %1038 = vmatprep.subr.mxu0 0.0
        %1039 = vmatpush1.msra.mxu0 %v525
        %1040 = vmatprep.subr.mxu0 0.0
        %1041 = vmatpush1.msra.mxu0 %v524
        %1042 = vmatprep.subr.mxu0 0.0
        %1043 = vmatpush1.msra.mxu0 %v523
        %1044 = vmatprep.subr.mxu0 0.0
        %1045 = vmatpush1.msra.mxu0 %v522
        %1046 = vmatprep.subr.mxu0 0.0
        %1047 = vmatpush1.msra.mxu0 %v521
        %1048 = vmatprep.subr.mxu0 0.0
        %1049 = vmatpush1.msra.mxu0 %v520
        %1050 = vmatprep.subr.mxu0 0.0
        %1051 = vmatpush2.msra.mxu0 0.0
        %1052 = vmatprep.subr.mxu0 0.0
        %1053 = vmatpush2.msra.mxu0 0.0
        %1054 = vmatprep.subr.mxu0 0.0
        %1055 = vmatpush2.msra.mxu0 0.0
        %1056 = vmatprep.subr.mxu0 0.0
        %1057 = vmatpush2.msra.mxu0 0.0
        %1058 = vmatprep.subr.mxu0 0.0
        %1059 = vmatpush2.msra.mxu0 0.0
        %1060 = vmatprep.subr.mxu0 0.0
        %1061 = vmatpush2.msra.mxu0 0.0
        %1062 = vmatprep.subr.mxu0 0.0
        %1063 = vmatpush2.msra.mxu0 0.0
        %1064 = vmatprep.subr.mxu0 0.0
        %1065 = vmatpush2.msra.mxu0 0.0
        %1066 = vmatprep.subr.mxu0 0.0
        %1067 = vmatpush2.msra.mxu0 0.0
        %1068 = vmatprep.subr.mxu0 0.0
        %1069 = vmatpush2.msra.mxu0 0.0
        %1070 = vmatprep.subr.mxu0 0.0
        %1071 = vmatpush2.msra.mxu0 0.0
        %1072 = vmatprep.subr.mxu0 0.0
        %1073 = vmatpush2.msra.mxu0 0.0
        %1074 = vmatprep.subr.mxu0 0.0
        %1075 = vmatpush2.msra.mxu0 0.0
        %1076 = vmatprep.subr.mxu0 0.0
        %1077 = vmatpush2.msra.mxu0 0.0
        %1078 = vmatprep.subr.mxu0 0.0
        %1079 = vmatpush2.msra.mxu0 0.0
        %1080 = vmatprep.subr.mxu0 0.0
        %1081 = vmatpush2.msra.mxu0 0.0
        %1082 = vmatprep.mubr.f32.mxu0 0.0
        %1083 = vmatmul.mubr.f32.gmra.mxu0 %v971
        %v1084 = vpop.f32.mrf.mxu0
        %v1085 = vadd.f32 0.0, %v1084
        %v1086 = vpop.f32.mrf.mxu0
        %1087 = vmatprep.mubr.f32.mxu0 0.0
        %1088 = vmatmul.mubr.f32.gmra.mxu0 %v974
        %v1089 = vpop.f32.mrf.mxu0
        %v1090 = vadd.f32 0.0, %v1089
        %v1091 = vpop.f32.mrf.mxu0
        %1092 = vmatprep.mubr.f32.mxu0 0.0
        %1093 = vmatmul.mubr.f32.gmra.mxu0 %v977
        %v1094 = vpop.f32.mrf.mxu0
        %v1095 = vadd.f32 0.0, %v1094
        %v1096 = vpop.f32.mrf.mxu0
        %1097 = vmatprep.mubr.f32.mxu0 0.0
        %1098 = vmatmul.mubr.f32.gmra.mxu0 %v980
        %v1099 = vpop.f32.mrf.mxu0
        %v1100 = vadd.f32 0.0, %v1099
        %v1101 = vpop.f32.mrf.mxu0
        %1102 = vmatprep.mubr.f32.mxu0 0.0
        %1103 = vmatmul.mubr.f32.gmra.mxu0 %v983
        %v1104 = vpop.f32.mrf.mxu0
        %v1105 = vadd.f32 0.0, %v1104
        %v1106 = vpop.f32.mrf.mxu0
        %1107 = vmatprep.mubr.f32.mxu0 0.0
        %1108 = vmatmul.mubr.f32.gmra.mxu0 %v986
        %v1109 = vpop.f32.mrf.mxu0
        %v1110 = vadd.f32 0.0, %v1109
        %v1111 = vpop.f32.mrf.mxu0
        %1112 = vmatprep.mubr.f32.mxu0 0.0
        %1113 = vmatmul.mubr.f32.gmra.mxu0 %v989
        %v1114 = vpop.f32.mrf.mxu0
        %v1115 = vadd.f32 0.0, %v1114
        %v1116 = vpop.f32.mrf.mxu0
        %1117 = vmatprep.mubr.f32.mxu0 0.0
        %1118 = vmatmul.mubr.f32.gmra.mxu0 %v992
        %v1119 = vpop.f32.mrf.mxu0
        %v1120 = vadd.f32 0.0, %v1119
        %v1121 = vpop.f32.mrf.mxu0
        %1122 = vmatprep.mubr.f32.mxu0 0.0
        %1123 = vmatmul.mubr.f32.gmra.mxu0 %v995
        %v1124 = vpop.f32.mrf.mxu0
        %v1125 = vadd.f32 0.0, %v1124
        %v1126 = vpop.f32.mrf.mxu0
        %1127 = vmatprep.mubr.f32.mxu0 0.0
        %1128 = vmatmul.mubr.f32.gmra.mxu0 %v998
        %v1129 = vpop.f32.mrf.mxu0
        %v1130 = vadd.f32 0.0, %v1129
        %v1131 = vpop.f32.mrf.mxu0
        %1132 = vmatprep.mubr.f32.mxu0 0.0
        %1133 = vmatmul.mubr.f32.gmra.mxu0 %v1001
        %v1134 = vpop.f32.mrf.mxu0
        %v1135 = vadd.f32 0.0, %v1134
        %v1136 = vpop.f32.mrf.mxu0
        %1137 = vmatprep.mubr.f32.mxu0 0.0
        %1138 = vmatmul.mubr.f32.gmra.mxu0 %v1004
        %v1139 = vpop.f32.mrf.mxu0
        %v1140 = vadd.f32 0.0, %v1139
        %v1141 = vpop.f32.mrf.mxu0
        %1142 = vmatprep.mubr.f32.mxu0 0.0
        %1143 = vmatmul.mubr.f32.gmra.mxu0 %v1007
        %v1144 = vpop.f32.mrf.mxu0
        %v1145 = vadd.f32 0.0, %v1144
        %v1146 = vpop.f32.mrf.mxu0
        %1147 = vmatprep.mubr.f32.mxu0 0.0
        %1148 = vmatmul.mubr.f32.gmra.mxu0 %v1010
        %v1149 = vpop.f32.mrf.mxu0
        %v1150 = vadd.f32 0.0, %v1149
        %v1151 = vpop.f32.mrf.mxu0
        %1152 = vmatprep.mubr.f32.mxu0 0.0
        %1153 = vmatmul.mubr.f32.gmra.mxu0 %v1013
        %v1154 = vpop.f32.mrf.mxu0
        %v1155 = vadd.f32 0.0, %v1154
        %v1156 = vpop.f32.mrf.mxu0
        %1157 = vmatprep.mubr.f32.mxu0 0.0
        %1158 = vmatmul.mubr.f32.gmra.mxu0 %v1016
        %v1159 = vpop.f32.mrf.mxu0
        %v1160 = vadd.f32 0.0, %v1159
        %v1161 = vpop.f32.mrf.mxu0
        %1162 = vdwg.mxu0
        %v1163 = vld [vmem:[%s4] sm:$0xff]
        %v1164 = vld [vmem:[%s4 + $0x8] sm:$0xff]
        %v1165 = vld [vmem:[%s4 + $0x10] sm:$0xff]
        %v1166 = vld [vmem:[%s4 + $0x18] sm:$0x1]
        %v1167 = vld [vmem:[%s5] sm:$0xff]
        %v1168 = vld [vmem:[%s5 + $0x8] sm:$0xff]
        %v1169 = vld [vmem:[%s5 + $0x10] sm:$0xff]
        %v1170 = vld [vmem:[%s5 + $0x18] sm:$0x1]
        %vm1171 = vcmask 203776
        %v1173 = vsel %vm1171, %v1085, 0
        %v1176 = vsel %vm1171, %v1090, 0
        %v1179 = vsel %vm1171, %v1095, 0
        %v1182 = vsel %vm1171, %v1100, 0
        %v1185 = vsel %vm1171, %v1105, 0
        %v1188 = vsel %vm1171, %v1110, 0
        %v1191 = vsel %vm1171, %v1115, 0
        %v1194 = vsel %vm1171, %v1120, 0
        %v1197 = vsel %vm1171, %v1125, 0
        %v1200 = vsel %vm1171, %v1130, 0
        %v1203 = vsel %vm1171, %v1135, 0
        %v1206 = vsel %vm1171, %v1140, 0
        %v1209 = vsel %vm1171, %v1145, 0
        %v1212 = vsel %vm1171, %v1150, 0
        %v1215 = vsel %vm1171, %v1155, 0
        %v1218 = vsel %vm1171, %v1160, 0
        %vm1220 = vcmask 1040384
        %v1222 = vsel %vm1220, %v1170, 0
        %1224 = vmatprep.subr.mxu0 0.0
        %1225 = vmatpush1.msra.mxu0 0.0
        %1226 = vmatprep.subr.mxu0 0.0
        %1227 = vmatpush1.msra.mxu0 0.0
        %1228 = vmatprep.subr.mxu0 0.0
        %1229 = vmatpush1.msra.mxu0 0.0
        %1230 = vmatprep.subr.mxu0 0.0
        %1231 = vmatpush1.msra.mxu0 0.0
        %1232 = vmatprep.subr.mxu0 0.0
        %1233 = vmatpush1.msra.mxu0 0.0
        %1234 = vmatprep.subr.mxu0 0.0
        %1235 = vmatpush1.msra.mxu0 0.0
        %1236 = vmatprep.subr.mxu0 0.0
        %1237 = vmatpush1.msra.mxu0 0.0
        %1238 = vmatprep.subr.mxu0 0.0
        %1239 = vmatpush1.msra.mxu0 0.0
        %1240 = vmatprep.subr.mxu0 0.0
        %1241 = vmatpush1.msra.mxu0 0.0
        %1242 = vmatprep.subr.mxu0 0.0
        %1243 = vmatpush1.msra.mxu0 0.0
        %1244 = vmatprep.subr.mxu0 0.0
        %1245 = vmatpush1.msra.mxu0 0.0
        %1246 = vmatprep.subr.mxu0 0.0
        %1247 = vmatpush1.msra.mxu0 0.0
        %1248 = vmatprep.subr.mxu0 0.0
        %1249 = vmatpush1.msra.mxu0 %v1222
        %1250 = vmatprep.subr.mxu0 0.0
        %1251 = vmatpush1.msra.mxu0 %v1169
        %1252 = vmatprep.subr.mxu0 0.0
        %1253 = vmatpush1.msra.mxu0 %v1168
        %1254 = vmatprep.subr.mxu0 0.0
        %1255 = vmatpush1.msra.mxu0 %v1167
        %1256 = vmatprep.subr.mxu0 0.0
        %1257 = vmatpush2.msra.mxu0 0.0
        %1258 = vmatprep.subr.mxu0 0.0
        %1259 = vmatpush2.msra.mxu0 0.0
        %1260 = vmatprep.subr.mxu0 0.0
        %1261 = vmatpush2.msra.mxu0 0.0
        %1262 = vmatprep.subr.mxu0 0.0
        %1263 = vmatpush2.msra.mxu0 0.0
        %1264 = vmatprep.subr.mxu0 0.0
        %1265 = vmatpush2.msra.mxu0 0.0
        %1266 = vmatprep.subr.mxu0 0.0
        %1267 = vmatpush2.msra.mxu0 0.0
        %1268 = vmatprep.subr.mxu0 0.0
        %1269 = vmatpush2.msra.mxu0 0.0
        %1270 = vmatprep.subr.mxu0 0.0
        %1271 = vmatpush2.msra.mxu0 0.0
        %1272 = vmatprep.subr.mxu0 0.0
        %1273 = vmatpush2.msra.mxu0 0.0
        %1274 = vmatprep.subr.mxu0 0.0
        %1275 = vmatpush2.msra.mxu0 0.0
        %1276 = vmatprep.subr.mxu0 0.0
        %1277 = vmatpush2.msra.mxu0 0.0
        %1278 = vmatprep.subr.mxu0 0.0
        %1279 = vmatpush2.msra.mxu0 0.0
        %1280 = vmatprep.subr.mxu0 0.0
        %1281 = vmatpush2.msra.mxu0 0.0
        %1282 = vmatprep.subr.mxu0 0.0
        %1283 = vmatpush2.msra.mxu0 0.0
        %1284 = vmatprep.subr.mxu0 0.0
        %1285 = vmatpush2.msra.mxu0 0.0
        %1286 = vmatprep.subr.mxu0 0.0
        %1287 = vmatpush2.msra.mxu0 0.0
        %1288 = vmatprep.mubr.f32.mxu0 0.0
        %1289 = vmatmul.mubr.f32.gmra.mxu0 %v1173
        %v1290 = vpop.f32.mrf.mxu0
        %v1291 = vadd.f32 0.0, %v1290
        %v1292 = vpop.f32.mrf.mxu0
        %1293 = vmatprep.mubr.f32.mxu0 0.0
        %1294 = vmatmul.mubr.f32.gmra.mxu0 %v1176
        %v1295 = vpop.f32.mrf.mxu0
        %v1296 = vadd.f32 0.0, %v1295
        %v1297 = vpop.f32.mrf.mxu0
        %1298 = vmatprep.mubr.f32.mxu0 0.0
        %1299 = vmatmul.mubr.f32.gmra.mxu0 %v1179
        %v1300 = vpop.f32.mrf.mxu0
        %v1301 = vadd.f32 0.0, %v1300
        %v1302 = vpop.f32.mrf.mxu0
        %1303 = vmatprep.mubr.f32.mxu0 0.0
        %1304 = vmatmul.mubr.f32.gmra.mxu0 %v1182
        %v1305 = vpop.f32.mrf.mxu0
        %v1306 = vadd.f32 0.0, %v1305
        %v1307 = vpop.f32.mrf.mxu0
        %1308 = vmatprep.mubr.f32.mxu0 0.0
        %1309 = vmatmul.mubr.f32.gmra.mxu0 %v1185
        %v1310 = vpop.f32.mrf.mxu0
        %v1311 = vadd.f32 0.0, %v1310
        %v1312 = vpop.f32.mrf.mxu0
        %1313 = vmatprep.mubr.f32.mxu0 0.0
        %1314 = vmatmul.mubr.f32.gmra.mxu0 %v1188
        %v1315 = vpop.f32.mrf.mxu0
        %v1316 = vadd.f32 0.0, %v1315
        %v1317 = vpop.f32.mrf.mxu0
        %1318 = vmatprep.mubr.f32.mxu0 0.0
        %1319 = vmatmul.mubr.f32.gmra.mxu0 %v1191
        %v1320 = vpop.f32.mrf.mxu0
        %v1321 = vadd.f32 0.0, %v1320
        %v1322 = vpop.f32.mrf.mxu0
        %1323 = vmatprep.mubr.f32.mxu0 0.0
        %1324 = vmatmul.mubr.f32.gmra.mxu0 %v1194
        %v1325 = vpop.f32.mrf.mxu0
        %v1326 = vadd.f32 0.0, %v1325
        %v1327 = vpop.f32.mrf.mxu0
        %1328 = vmatprep.mubr.f32.mxu0 0.0
        %1329 = vmatmul.mubr.f32.gmra.mxu0 %v1197
        %v1330 = vpop.f32.mrf.mxu0
        %v1331 = vadd.f32 0.0, %v1330
        %v1332 = vpop.f32.mrf.mxu0
        %1333 = vmatprep.mubr.f32.mxu0 0.0
        %1334 = vmatmul.mubr.f32.gmra.mxu0 %v1200
        %v1335 = vpop.f32.mrf.mxu0
        %v1336 = vadd.f32 0.0, %v1335
        %v1337 = vpop.f32.mrf.mxu0
        %1338 = vmatprep.mubr.f32.mxu0 0.0
        %1339 = vmatmul.mubr.f32.gmra.mxu0 %v1203
        %v1340 = vpop.f32.mrf.mxu0
        %v1341 = vadd.f32 0.0, %v1340
        %v1342 = vpop.f32.mrf.mxu0
        %1343 = vmatprep.mubr.f32.mxu0 0.0
        %1344 = vmatmul.mubr.f32.gmra.mxu0 %v1206
        %v1345 = vpop.f32.mrf.mxu0
        %v1346 = vadd.f32 0.0, %v1345
        %v1347 = vpop.f32.mrf.mxu0
        %1348 = vmatprep.mubr.f32.mxu0 0.0
        %1349 = vmatmul.mubr.f32.gmra.mxu0 %v1209
        %v1350 = vpop.f32.mrf.mxu0
        %v1351 = vadd.f32 0.0, %v1350
        %v1352 = vpop.f32.mrf.mxu0
        %1353 = vmatprep.mubr.f32.mxu0 0.0
        %1354 = vmatmul.mubr.f32.gmra.mxu0 %v1212
        %v1355 = vpop.f32.mrf.mxu0
        %v1356 = vadd.f32 0.0, %v1355
        %v1357 = vpop.f32.mrf.mxu0
        %1358 = vmatprep.mubr.f32.mxu0 0.0
        %1359 = vmatmul.mubr.f32.gmra.mxu0 %v1215
        %v1360 = vpop.f32.mrf.mxu0
        %v1361 = vadd.f32 0.0, %v1360
        %v1362 = vpop.f32.mrf.mxu0
        %1363 = vmatprep.mubr.f32.mxu0 0.0
        %1364 = vmatmul.mubr.f32.gmra.mxu0 %v1218
        %v1365 = vpop.f32.mrf.mxu0
        %v1366 = vadd.f32 0.0, %v1365
        %v1367 = vpop.f32.mrf.mxu0
        %1368 = vdwg.mxu0
        %v1370 = vsel %vm1171, %v892, 0
        %v1373 = vsel %vm1171, %v897, 0
        %v1376 = vsel %vm1171, %v902, 0
        %v1379 = vsel %vm1171, %v907, 0
        %v1382 = vsel %vm1171, %v912, 0
        %v1385 = vsel %vm1171, %v917, 0
        %v1388 = vsel %vm1171, %v922, 0
        %v1391 = vsel %vm1171, %v927, 0
        %v1394 = vsel %vm1171, %v932, 0
        %v1397 = vsel %vm1171, %v937, 0
        %v1400 = vsel %vm1171, %v942, 0
        %v1403 = vsel %vm1171, %v947, 0
        %v1406 = vsel %vm1171, %v952, 0
        %v1409 = vsel %vm1171, %v957, 0
        %v1412 = vsel %vm1171, %v962, 0
        %v1415 = vsel %vm1171, %v967, 0
        %v1418 = vsel %vm1220, %v1166, 0
        %1420 = vmatprep.subr.mxu0 0.0
        %1421 = vmatpush1.msra.mxu0 0.0
        %1422 = vmatprep.subr.mxu0 0.0
        %1423 = vmatpush1.msra.mxu0 0.0
        %1424 = vmatprep.subr.mxu0 0.0
        %1425 = vmatpush1.msra.mxu0 0.0
        %1426 = vmatprep.subr.mxu0 0.0
        %1427 = vmatpush1.msra.mxu0 0.0
        %1428 = vmatprep.subr.mxu0 0.0
        %1429 = vmatpush1.msra.mxu0 0.0
        %1430 = vmatprep.subr.mxu0 0.0
        %1431 = vmatpush1.msra.mxu0 0.0
        %1432 = vmatprep.subr.mxu0 0.0
        %1433 = vmatpush1.msra.mxu0 0.0
        %1434 = vmatprep.subr.mxu0 0.0
        %1435 = vmatpush1.msra.mxu0 0.0
        %1436 = vmatprep.subr.mxu0 0.0
        %1437 = vmatpush1.msra.mxu0 0.0
        %1438 = vmatprep.subr.mxu0 0.0
        %1439 = vmatpush1.msra.mxu0 0.0
        %1440 = vmatprep.subr.mxu0 0.0
        %1441 = vmatpush1.msra.mxu0 0.0
        %1442 = vmatprep.subr.mxu0 0.0
        %1443 = vmatpush1.msra.mxu0 0.0
        %1444 = vmatprep.subr.mxu0 0.0
        %1445 = vmatpush1.msra.mxu0 %v1418
        %1446 = vmatprep.subr.mxu0 0.0
        %1447 = vmatpush1.msra.mxu0 %v1165
        %1448 = vmatprep.subr.mxu0 0.0
        %1449 = vmatpush1.msra.mxu0 %v1164
        %1450 = vmatprep.subr.mxu0 0.0
        %1451 = vmatpush1.msra.mxu0 %v1163
        %1452 = vmatprep.subr.mxu0 0.0
        %1453 = vmatpush2.msra.mxu0 0.0
        %1454 = vmatprep.subr.mxu0 0.0
        %1455 = vmatpush2.msra.mxu0 0.0
        %1456 = vmatprep.subr.mxu0 0.0
        %1457 = vmatpush2.msra.mxu0 0.0
        %1458 = vmatprep.subr.mxu0 0.0
        %1459 = vmatpush2.msra.mxu0 0.0
        %1460 = vmatprep.subr.mxu0 0.0
        %1461 = vmatpush2.msra.mxu0 0.0
        %1462 = vmatprep.subr.mxu0 0.0
        %1463 = vmatpush2.msra.mxu0 0.0
        %1464 = vmatprep.subr.mxu0 0.0
        %1465 = vmatpush2.msra.mxu0 0.0
        %1466 = vmatprep.subr.mxu0 0.0
        %1467 = vmatpush2.msra.mxu0 0.0
        %1468 = vmatprep.subr.mxu0 0.0
        %1469 = vmatpush2.msra.mxu0 0.0
        %1470 = vmatprep.subr.mxu0 0.0
        %1471 = vmatpush2.msra.mxu0 0.0
        %1472 = vmatprep.subr.mxu0 0.0
        %1473 = vmatpush2.msra.mxu0 0.0
        %1474 = vmatprep.subr.mxu0 0.0
        %1475 = vmatpush2.msra.mxu0 0.0
        %1476 = vmatprep.subr.mxu0 0.0
        %1477 = vmatpush2.msra.mxu0 0.0
        %1478 = vmatprep.subr.mxu0 0.0
        %1479 = vmatpush2.msra.mxu0 0.0
        %1480 = vmatprep.subr.mxu0 0.0
        %1481 = vmatpush2.msra.mxu0 0.0
        %1482 = vmatprep.subr.mxu0 0.0
        %1483 = vmatpush2.msra.mxu0 0.0
        %1484 = vmatprep.mubr.f32.mxu0 0.0
        %1485 = vmatmul.mubr.f32.gmra.mxu0 %v1370
        %v1486 = vpop.f32.mrf.mxu0
        %v1487 = vadd.f32 %v1291, %v1486
        %v1488 = vpop.f32.mrf.mxu0
        %1489 = vmatprep.mubr.f32.mxu0 0.0
        %1490 = vmatmul.mubr.f32.gmra.mxu0 %v1373
        %v1491 = vpop.f32.mrf.mxu0
        %v1492 = vadd.f32 %v1296, %v1491
        %v1493 = vpop.f32.mrf.mxu0
        %1494 = vmatprep.mubr.f32.mxu0 0.0
        %1495 = vmatmul.mubr.f32.gmra.mxu0 %v1376
        %v1496 = vpop.f32.mrf.mxu0
        %v1497 = vadd.f32 %v1301, %v1496
        %v1498 = vpop.f32.mrf.mxu0
        %1499 = vmatprep.mubr.f32.mxu0 0.0
        %1500 = vmatmul.mubr.f32.gmra.mxu0 %v1379
        %v1501 = vpop.f32.mrf.mxu0
        %v1502 = vadd.f32 %v1306, %v1501
        %v1503 = vpop.f32.mrf.mxu0
        %1504 = vmatprep.mubr.f32.mxu0 0.0
        %1505 = vmatmul.mubr.f32.gmra.mxu0 %v1382
        %v1506 = vpop.f32.mrf.mxu0
        %v1507 = vadd.f32 %v1311, %v1506
        %v1508 = vpop.f32.mrf.mxu0
        %1509 = vmatprep.mubr.f32.mxu0 0.0
        %1510 = vmatmul.mubr.f32.gmra.mxu0 %v1385
        %v1511 = vpop.f32.mrf.mxu0
        %v1512 = vadd.f32 %v1316, %v1511
        %v1513 = vpop.f32.mrf.mxu0
        %1514 = vmatprep.mubr.f32.mxu0 0.0
        %1515 = vmatmul.mubr.f32.gmra.mxu0 %v1388
        %v1516 = vpop.f32.mrf.mxu0
        %v1517 = vadd.f32 %v1321, %v1516
        %v1518 = vpop.f32.mrf.mxu0
        %1519 = vmatprep.mubr.f32.mxu0 0.0
        %1520 = vmatmul.mubr.f32.gmra.mxu0 %v1391
        %v1521 = vpop.f32.mrf.mxu0
        %v1522 = vadd.f32 %v1326, %v1521
        %v1523 = vpop.f32.mrf.mxu0
        %1524 = vmatprep.mubr.f32.mxu0 0.0
        %1525 = vmatmul.mubr.f32.gmra.mxu0 %v1394
        %v1526 = vpop.f32.mrf.mxu0
        %v1527 = vadd.f32 %v1331, %v1526
        %v1528 = vpop.f32.mrf.mxu0
        %1529 = vmatprep.mubr.f32.mxu0 0.0
        %1530 = vmatmul.mubr.f32.gmra.mxu0 %v1397
        %v1531 = vpop.f32.mrf.mxu0
        %v1532 = vadd.f32 %v1336, %v1531
        %v1533 = vpop.f32.mrf.mxu0
        %1534 = vmatprep.mubr.f32.mxu0 0.0
        %1535 = vmatmul.mubr.f32.gmra.mxu0 %v1400
        %v1536 = vpop.f32.mrf.mxu0
        %v1537 = vadd.f32 %v1341, %v1536
        %v1538 = vpop.f32.mrf.mxu0
        %1539 = vmatprep.mubr.f32.mxu0 0.0
        %1540 = vmatmul.mubr.f32.gmra.mxu0 %v1403
        %v1541 = vpop.f32.mrf.mxu0
        %v1542 = vadd.f32 %v1346, %v1541
        %v1543 = vpop.f32.mrf.mxu0
        %1544 = vmatprep.mubr.f32.mxu0 0.0
        %1545 = vmatmul.mubr.f32.gmra.mxu0 %v1406
        %v1546 = vpop.f32.mrf.mxu0
        %v1547 = vadd.f32 %v1351, %v1546
        %v1548 = vpop.f32.mrf.mxu0
        %1549 = vmatprep.mubr.f32.mxu0 0.0
        %1550 = vmatmul.mubr.f32.gmra.mxu0 %v1409
        %v1551 = vpop.f32.mrf.mxu0
        %v1552 = vadd.f32 %v1356, %v1551
        %v1553 = vpop.f32.mrf.mxu0
        %1554 = vmatprep.mubr.f32.mxu0 0.0
        %1555 = vmatmul.mubr.f32.gmra.mxu0 %v1412
        %v1556 = vpop.f32.mrf.mxu0
        %v1557 = vadd.f32 %v1361, %v1556
        %v1558 = vpop.f32.mrf.mxu0
        %1559 = vmatprep.mubr.f32.mxu0 0.0
        %1560 = vmatmul.mubr.f32.gmra.mxu0 %v1415
        %v1561 = vpop.f32.mrf.mxu0
        %v1562 = vadd.f32 %v1366, %v1561
        %v1563 = vpop.f32.mrf.mxu0
        %1564 = vdwg.mxu0
        %v1565 = vld [vmem:[%s6] sm:$0x1]
        %v1567 = vlaneseq
        %v1568 = vshrl.u32 %v1567, 7
        %v1569 = vsub.s32 0, %v1568
        %v1570 = vrot.slane %v1565, %v1569
        %v1572 = vadd.f32 %v1487, %v1570
        %v1573 = vadd.f32 %v1492, %v1570
        %v1574 = vadd.f32 %v1497, %v1570
        %v1575 = vadd.f32 %v1502, %v1570
        %v1576 = vadd.f32 %v1507, %v1570
        %v1577 = vadd.f32 %v1512, %v1570
        %v1578 = vadd.f32 %v1517, %v1570
        %v1579 = vadd.f32 %v1522, %v1570
        %v1580 = vadd.f32 %v1527, %v1570
        %v1581 = vadd.f32 %v1532, %v1570
        %v1582 = vadd.f32 %v1537, %v1570
        %v1583 = vadd.f32 %v1542, %v1570
        %v1584 = vadd.f32 %v1547, %v1570
        %v1585 = vadd.f32 %v1552, %v1570
        %v1586 = vadd.f32 %v1557, %v1570
        %v1587 = vadd.f32 %v1562, %v1570
        %v1588 = vmax.f32 %v1572, 0.0
        %v1589 = vmax.f32 %v1573, 0.0
        %v1590 = vmax.f32 %v1574, 0.0
        %v1591 = vmax.f32 %v1575, 0.0
        %v1592 = vmax.f32 %v1576, 0.0
        %v1593 = vmax.f32 %v1577, 0.0
        %v1594 = vmax.f32 %v1578, 0.0
        %v1595 = vmax.f32 %v1579, 0.0
        %v1596 = vmax.f32 %v1580, 0.0
        %v1597 = vmax.f32 %v1581, 0.0
        %v1598 = vmax.f32 %v1582, 0.0
        %v1599 = vmax.f32 %v1583, 0.0
        %v1600 = vmax.f32 %v1584, 0.0
        %v1601 = vmax.f32 %v1585, 0.0
        %v1602 = vmax.f32 %v1586, 0.0
        %v1603 = vmax.f32 %v1587, 0.0
        %v1604 = vld [vmem:[%s7] sm:$0xff]
        %v1605 = vld [vmem:[%s7 + $0x8] sm:$0xff]
        %v1606 = vld [vmem:[%s7 + $0x10] sm:$0xff]
        %v1607 = vld [vmem:[%s7 + $0x18] sm:$0xff]
        %v1608 = vld [vmem:[%s8] sm:$0x1]
        %v1610 = vlaneseq
        %v1611 = vshrl.u32 %v1610, 7
        %v1612 = vsub.s32 0, %v1611
        %v1613 = vrot.slane %v1608, %v1612
        %vm1615 = vcmask 261120
        %v1617 = vsel %vm1615, %v1588, 0
        %v1620 = vsel %vm1615, %v1589, 0
        %v1623 = vsel %vm1615, %v1590, 0
        %v1626 = vsel %vm1615, %v1591, 0
        %v1629 = vsel %vm1615, %v1592, 0
        %v1632 = vsel %vm1615, %v1593, 0
        %v1635 = vsel %vm1615, %v1594, 0
        %v1638 = vsel %vm1615, %v1595, 0
        %v1641 = vsel %vm1615, %v1596, 0
        %v1644 = vsel %vm1615, %v1597, 0
        %v1647 = vsel %vm1615, %v1598, 0
        %v1650 = vsel %vm1615, %v1599, 0
        %v1653 = vsel %vm1615, %v1600, 0
        %v1656 = vsel %vm1615, %v1601, 0
        %v1659 = vsel %vm1615, %v1602, 0
        %v1662 = vsel %vm1615, %v1603, 0
        %1664 = vmatprep.subr.mxu0 0.0
        %1665 = vmatpush1.msra.mxu0 0.0
        %1666 = vmatprep.subr.mxu0 0.0
        %1667 = vmatpush1.msra.mxu0 0.0
        %1668 = vmatprep.subr.mxu0 0.0
        %1669 = vmatpush1.msra.mxu0 0.0
        %1670 = vmatprep.subr.mxu0 0.0
        %1671 = vmatpush1.msra.mxu0 0.0
        %1672 = vmatprep.subr.mxu0 0.0
        %1673 = vmatpush1.msra.mxu0 0.0
        %1674 = vmatprep.subr.mxu0 0.0
        %1675 = vmatpush1.msra.mxu0 0.0
        %1676 = vmatprep.subr.mxu0 0.0
        %1677 = vmatpush1.msra.mxu0 0.0
        %1678 = vmatprep.subr.mxu0 0.0
        %1679 = vmatpush1.msra.mxu0 0.0
        %1680 = vmatprep.subr.mxu0 0.0
        %1681 = vmatpush1.msra.mxu0 0.0
        %1682 = vmatprep.subr.mxu0 0.0
        %1683 = vmatpush1.msra.mxu0 0.0
        %1684 = vmatprep.subr.mxu0 0.0
        %1685 = vmatpush1.msra.mxu0 0.0
        %1686 = vmatprep.subr.mxu0 0.0
        %1687 = vmatpush1.msra.mxu0 0.0
        %1688 = vmatprep.subr.mxu0 0.0
        %1689 = vmatpush1.msra.mxu0 %v1607
        %1690 = vmatprep.subr.mxu0 0.0
        %1691 = vmatpush1.msra.mxu0 %v1606
        %1692 = vmatprep.subr.mxu0 0.0
        %1693 = vmatpush1.msra.mxu0 %v1605
        %1694 = vmatprep.subr.mxu0 0.0
        %1695 = vmatpush1.msra.mxu0 %v1604
        %1696 = vmatprep.subr.mxu0 0.0
        %1697 = vmatpush2.msra.mxu0 0.0
        %1698 = vmatprep.subr.mxu0 0.0
        %1699 = vmatpush2.msra.mxu0 0.0
        %1700 = vmatprep.subr.mxu0 0.0
        %1701 = vmatpush2.msra.mxu0 0.0
        %1702 = vmatprep.subr.mxu0 0.0
        %1703 = vmatpush2.msra.mxu0 0.0
        %1704 = vmatprep.subr.mxu0 0.0
        %1705 = vmatpush2.msra.mxu0 0.0
        %1706 = vmatprep.subr.mxu0 0.0
        %1707 = vmatpush2.msra.mxu0 0.0
        %1708 = vmatprep.subr.mxu0 0.0
        %1709 = vmatpush2.msra.mxu0 0.0
        %1710 = vmatprep.subr.mxu0 0.0
        %1711 = vmatpush2.msra.mxu0 0.0
        %1712 = vmatprep.subr.mxu0 0.0
        %1713 = vmatpush2.msra.mxu0 0.0
        %1714 = vmatprep.subr.mxu0 0.0
        %1715 = vmatpush2.msra.mxu0 0.0
        %1716 = vmatprep.subr.mxu0 0.0
        %1717 = vmatpush2.msra.mxu0 0.0
        %1718 = vmatprep.subr.mxu0 0.0
        %1719 = vmatpush2.msra.mxu0 0.0
        %1720 = vmatprep.subr.mxu0 0.0
        %1721 = vmatpush2.msra.mxu0 0.0
        %1722 = vmatprep.subr.mxu0 0.0
        %1723 = vmatpush2.msra.mxu0 0.0
        %1724 = vmatprep.subr.mxu0 0.0
        %1725 = vmatpush2.msra.mxu0 0.0
        %1726 = vmatprep.subr.mxu0 0.0
        %1727 = vmatpush2.msra.mxu0 0.0
        %1728 = vmatprep.mubr.f32.mxu0 0.0
        %1729 = vmatmul.mubr.f32.gmra.mxu0 %v1617
        %v1730 = vpop.f32.mrf.mxu0
        %v1731 = vadd.f32 %v1613, %v1730
        %v1732 = vpop.f32.mrf.mxu0
        %1733 = vmatprep.mubr.f32.mxu0 0.0
        %1734 = vmatmul.mubr.f32.gmra.mxu0 %v1620
        %v1735 = vpop.f32.mrf.mxu0
        %v1736 = vadd.f32 %v1613, %v1735
        %v1737 = vpop.f32.mrf.mxu0
        %1738 = vmatprep.mubr.f32.mxu0 0.0
        %1739 = vmatmul.mubr.f32.gmra.mxu0 %v1623
        %v1740 = vpop.f32.mrf.mxu0
        %v1741 = vadd.f32 %v1613, %v1740
        %v1742 = vpop.f32.mrf.mxu0
        %1743 = vmatprep.mubr.f32.mxu0 0.0
        %1744 = vmatmul.mubr.f32.gmra.mxu0 %v1626
        %v1745 = vpop.f32.mrf.mxu0
        %v1746 = vadd.f32 %v1613, %v1745
        %v1747 = vpop.f32.mrf.mxu0
        %1748 = vmatprep.mubr.f32.mxu0 0.0
        %1749 = vmatmul.mubr.f32.gmra.mxu0 %v1629
        %v1750 = vpop.f32.mrf.mxu0
        %v1751 = vadd.f32 %v1613, %v1750
        %v1752 = vpop.f32.mrf.mxu0
        %1753 = vmatprep.mubr.f32.mxu0 0.0
        %1754 = vmatmul.mubr.f32.gmra.mxu0 %v1632
        %v1755 = vpop.f32.mrf.mxu0
        %v1756 = vadd.f32 %v1613, %v1755
        %v1757 = vpop.f32.mrf.mxu0
        %1758 = vmatprep.mubr.f32.mxu0 0.0
        %1759 = vmatmul.mubr.f32.gmra.mxu0 %v1635
        %v1760 = vpop.f32.mrf.mxu0
        %v1761 = vadd.f32 %v1613, %v1760
        %v1762 = vpop.f32.mrf.mxu0
        %1763 = vmatprep.mubr.f32.mxu0 0.0
        %1764 = vmatmul.mubr.f32.gmra.mxu0 %v1638
        %v1765 = vpop.f32.mrf.mxu0
        %v1766 = vadd.f32 %v1613, %v1765
        %v1767 = vpop.f32.mrf.mxu0
        %1768 = vmatprep.mubr.f32.mxu0 0.0
        %1769 = vmatmul.mubr.f32.gmra.mxu0 %v1641
        %v1770 = vpop.f32.mrf.mxu0
        %v1771 = vadd.f32 %v1613, %v1770
        %v1772 = vpop.f32.mrf.mxu0
        %1773 = vmatprep.mubr.f32.mxu0 0.0
        %1774 = vmatmul.mubr.f32.gmra.mxu0 %v1644
        %v1775 = vpop.f32.mrf.mxu0
        %v1776 = vadd.f32 %v1613, %v1775
        %v1777 = vpop.f32.mrf.mxu0
        %1778 = vmatprep.mubr.f32.mxu0 0.0
        %1779 = vmatmul.mubr.f32.gmra.mxu0 %v1647
        %v1780 = vpop.f32.mrf.mxu0
        %v1781 = vadd.f32 %v1613, %v1780
        %v1782 = vpop.f32.mrf.mxu0
        %1783 = vmatprep.mubr.f32.mxu0 0.0
        %1784 = vmatmul.mubr.f32.gmra.mxu0 %v1650
        %v1785 = vpop.f32.mrf.mxu0
        %v1786 = vadd.f32 %v1613, %v1785
        %v1787 = vpop.f32.mrf.mxu0
        %1788 = vmatprep.mubr.f32.mxu0 0.0
        %1789 = vmatmul.mubr.f32.gmra.mxu0 %v1653
        %v1790 = vpop.f32.mrf.mxu0
        %v1791 = vadd.f32 %v1613, %v1790
        %v1792 = vpop.f32.mrf.mxu0
        %1793 = vmatprep.mubr.f32.mxu0 0.0
        %1794 = vmatmul.mubr.f32.gmra.mxu0 %v1656
        %v1795 = vpop.f32.mrf.mxu0
        %v1796 = vadd.f32 %v1613, %v1795
        %v1797 = vpop.f32.mrf.mxu0
        %1798 = vmatprep.mubr.f32.mxu0 0.0
        %1799 = vmatmul.mubr.f32.gmra.mxu0 %v1659
        %v1800 = vpop.f32.mrf.mxu0
        %v1801 = vadd.f32 %v1613, %v1800
        %v1802 = vpop.f32.mrf.mxu0
        %1803 = vmatprep.mubr.f32.mxu0 0.0
        %1804 = vmatmul.mubr.f32.gmra.mxu0 %v1662
        %v1805 = vpop.f32.mrf.mxu0
        %v1806 = vadd.f32 %v1613, %v1805
        %v1807 = vpop.f32.mrf.mxu0
        %1808 = vdwg.mxu0
        %v1809 = vld [vmem:[%s519] sm:$0xff]
        %v1810 = vld [vmem:[%s519 + $0x8] sm:$0xff]
        %v1811 = vld [vmem:[%s519 + $0x10] sm:$0xff]
        %v1812 = vld [vmem:[%s519 + $0x18] sm:$0xff]
        %v1813 = vld [vmem:[%s519 + $0x20] sm:$0xff]
        %v1814 = vld [vmem:[%s519 + $0x28] sm:$0xff]
        %v1815 = vld [vmem:[%s519 + $0x30] sm:$0xff]
        %v1816 = vld [vmem:[%s519 + $0x38] sm:$0xff]
        %v1817 = vld [vmem:[%s519 + $0x40] sm:$0xff]
        %v1818 = vld [vmem:[%s519 + $0x48] sm:$0xff]
        %v1819 = vld [vmem:[%s519 + $0x50] sm:$0xff]
        %v1820 = vld [vmem:[%s519 + $0x58] sm:$0xff]
        %v1821 = vld [vmem:[%s519 + $0x60] sm:$0xff]
        %v1822 = vld [vmem:[%s519 + $0x68] sm:$0xff]
        %v1823 = vld [vmem:[%s519 + $0x70] sm:$0xff]
        %v1824 = vld [vmem:[%s519 + $0x78] sm:$0xff]
        %1826 = vset.pattern.permute.xlu0 0
        %1827 = vperm.xlu0 %1826, %v1809
        %v1828 = vpop.permute.xlu0 %1827
        %1831 = vset.pattern.permute.xlu0 0
        %1832 = vperm.xlu0 %1831, %v1810
        %v1833 = vpop.permute.xlu0 %1832
        %1836 = vset.pattern.permute.xlu0 0
        %1837 = vperm.xlu0 %1836, %v1811
        %v1838 = vpop.permute.xlu0 %1837
        %1841 = vset.pattern.permute.xlu0 0
        %1842 = vperm.xlu0 %1841, %v1812
        %v1843 = vpop.permute.xlu0 %1842
        %1846 = vset.pattern.permute.xlu0 0
        %1847 = vperm.xlu0 %1846, %v1813
        %v1848 = vpop.permute.xlu0 %1847
        %1851 = vset.pattern.permute.xlu0 0
        %1852 = vperm.xlu0 %1851, %v1814
        %v1853 = vpop.permute.xlu0 %1852
        %1856 = vset.pattern.permute.xlu0 0
        %1857 = vperm.xlu0 %1856, %v1815
        %v1858 = vpop.permute.xlu0 %1857
        %1861 = vset.pattern.permute.xlu0 0
        %1862 = vperm.xlu0 %1861, %v1816
        %v1863 = vpop.permute.xlu0 %1862
        %1866 = vset.pattern.permute.xlu0 0
        %1867 = vperm.xlu0 %1866, %v1817
        %v1868 = vpop.permute.xlu0 %1867
        %1871 = vset.pattern.permute.xlu0 0
        %1872 = vperm.xlu0 %1871, %v1818
        %v1873 = vpop.permute.xlu0 %1872
        %1876 = vset.pattern.permute.xlu0 0
        %1877 = vperm.xlu0 %1876, %v1819
        %v1878 = vpop.permute.xlu0 %1877
        %1881 = vset.pattern.permute.xlu0 0
        %1882 = vperm.xlu0 %1881, %v1820
        %v1883 = vpop.permute.xlu0 %1882
        %1886 = vset.pattern.permute.xlu0 0
        %1887 = vperm.xlu0 %1886, %v1821
        %v1888 = vpop.permute.xlu0 %1887
        %1891 = vset.pattern.permute.xlu0 0
        %1892 = vperm.xlu0 %1891, %v1822
        %v1893 = vpop.permute.xlu0 %1892
        %1896 = vset.pattern.permute.xlu0 0
        %1897 = vperm.xlu0 %1896, %v1823
        %v1898 = vpop.permute.xlu0 %1897
        %1901 = vset.pattern.permute.xlu0 0
        %1902 = vperm.xlu0 %1901, %v1824
        %v1903 = vpop.permute.xlu0 %1902
        %v1905 = vmul.f32 %v1731, %v1828
        %v1906 = vmul.f32 %v1736, %v1833
        %v1907 = vmul.f32 %v1741, %v1838
        %v1908 = vmul.f32 %v1746, %v1843
        %v1909 = vmul.f32 %v1751, %v1848
        %v1910 = vmul.f32 %v1756, %v1853
        %v1911 = vmul.f32 %v1761, %v1858
        %v1912 = vmul.f32 %v1766, %v1863
        %v1913 = vmul.f32 %v1771, %v1868
        %v1914 = vmul.f32 %v1776, %v1873
        %v1915 = vmul.f32 %v1781, %v1878
        %v1916 = vmul.f32 %v1786, %v1883
        %v1917 = vmul.f32 %v1791, %v1888
        %v1918 = vmul.f32 %v1796, %v1893
        %v1919 = vmul.f32 %v1801, %v1898
        %v1920 = vmul.f32 %v1806, %v1903
        %1921 = vmatprep.subr.mxu0 0.0
        %1922 = vmatpush1.msra.mxu0 %v1920
        %1923 = vmatprep.subr.mxu0 0.0
        %1924 = vmatpush1.msra.mxu0 %v1919
        %1925 = vmatprep.subr.mxu0 0.0
        %1926 = vmatpush1.msra.mxu0 %v1918
        %1927 = vmatprep.subr.mxu0 0.0
        %1928 = vmatpush1.msra.mxu0 %v1917
        %1929 = vmatprep.subr.mxu0 0.0
        %1930 = vmatpush1.msra.mxu0 %v1916
        %1931 = vmatprep.subr.mxu0 0.0
        %1932 = vmatpush1.msra.mxu0 %v1915
        %1933 = vmatprep.subr.mxu0 0.0
        %1934 = vmatpush1.msra.mxu0 %v1914
        %1935 = vmatprep.subr.mxu0 0.0
        %1936 = vmatpush1.msra.mxu0 %v1913
        %1937 = vmatprep.subr.mxu0 0.0
        %1938 = vmatpush1.msra.mxu0 %v1912
        %1939 = vmatprep.subr.mxu0 0.0
        %1940 = vmatpush1.msra.mxu0 %v1911
        %1941 = vmatprep.subr.mxu0 0.0
        %1942 = vmatpush1.msra.mxu0 %v1910
        %1943 = vmatprep.subr.mxu0 0.0
        %1944 = vmatpush1.msra.mxu0 %v1909
        %1945 = vmatprep.subr.mxu0 0.0
        %1946 = vmatpush1.msra.mxu0 %v1908
        %1947 = vmatprep.subr.mxu0 0.0
        %1948 = vmatpush1.msra.mxu0 %v1907
        %1949 = vmatprep.subr.mxu0 0.0
        %1950 = vmatpush1.msra.mxu0 %v1906
        %1951 = vmatprep.subr.mxu0 0.0
        %1952 = vmatpush1.msra.mxu0 %v1905
        %1953 = vmatprep.subr.mxu0 0.0
        %1954 = vmatpush2.msra.mxu0 0.0
        %1955 = vmatprep.subr.mxu0 0.0
        %1956 = vmatpush2.msra.mxu0 0.0
        %1957 = vmatprep.subr.mxu0 0.0
        %1958 = vmatpush2.msra.mxu0 0.0
        %1959 = vmatprep.subr.mxu0 0.0
        %1960 = vmatpush2.msra.mxu0 0.0
        %1961 = vmatprep.subr.mxu0 0.0
        %1962 = vmatpush2.msra.mxu0 0.0
        %1963 = vmatprep.subr.mxu0 0.0
        %1964 = vmatpush2.msra.mxu0 0.0
        %1965 = vmatprep.subr.mxu0 0.0
        %1966 = vmatpush2.msra.mxu0 0.0
        %1967 = vmatprep.subr.mxu0 0.0
        %1968 = vmatpush2.msra.mxu0 0.0
        %1969 = vmatprep.subr.mxu0 0.0
        %1970 = vmatpush2.msra.mxu0 0.0
        %1971 = vmatprep.subr.mxu0 0.0
        %1972 = vmatpush2.msra.mxu0 0.0
        %1973 = vmatprep.subr.mxu0 0.0
        %1974 = vmatpush2.msra.mxu0 0.0
        %1975 = vmatprep.subr.mxu0 0.0
        %1976 = vmatpush2.msra.mxu0 0.0
        %1977 = vmatprep.subr.mxu0 0.0
        %1978 = vmatpush2.msra.mxu0 0.0
        %1979 = vmatprep.subr.mxu0 0.0
        %1980 = vmatpush2.msra.mxu0 0.0
        %1981 = vmatprep.subr.mxu0 0.0
        %1982 = vmatpush2.msra.mxu0 0.0
        %1983 = vmatprep.subr.mxu0 0.0
        %1984 = vmatpush2.msra.mxu0 0.0
        %1985 = vmatprep.mubr.f32.mxu0 0.0
        %1986 = vmatmul.mubr.f32.gmra.mxu0 %v768
        %v1987 = vpop.f32.mrf.mxu0
        %v1988 = vadd.f32 0.0, %v1987
        %v1989 = vpop.f32.mrf.mxu0
        %1990 = vmatprep.mubr.f32.mxu0 0.0
        %1991 = vmatmul.mubr.f32.gmra.mxu0 %v769
        %v1992 = vpop.f32.mrf.mxu0
        %v1993 = vadd.f32 0.0, %v1992
        %v1994 = vpop.f32.mrf.mxu0
        %1995 = vmatprep.mubr.f32.mxu0 0.0
        %1996 = vmatmul.mubr.f32.gmra.mxu0 %v770
        %v1997 = vpop.f32.mrf.mxu0
        %v1998 = vadd.f32 0.0, %v1997
        %v1999 = vpop.f32.mrf.mxu0
        %2000 = vmatprep.mubr.f32.mxu0 0.0
        %2001 = vmatmul.mubr.f32.gmra.mxu0 %v771
        %v2002 = vpop.f32.mrf.mxu0
        %v2003 = vadd.f32 0.0, %v2002
        %v2004 = vpop.f32.mrf.mxu0
        %2005 = vmatprep.mubr.f32.mxu0 0.0
        %2006 = vmatmul.mubr.f32.gmra.mxu0 %v772
        %v2007 = vpop.f32.mrf.mxu0
        %v2008 = vadd.f32 0.0, %v2007
        %v2009 = vpop.f32.mrf.mxu0
        %2010 = vmatprep.mubr.f32.mxu0 0.0
        %2011 = vmatmul.mubr.f32.gmra.mxu0 %v773
        %v2012 = vpop.f32.mrf.mxu0
        %v2013 = vadd.f32 0.0, %v2012
        %v2014 = vpop.f32.mrf.mxu0
        %2015 = vmatprep.mubr.f32.mxu0 0.0
        %2016 = vmatmul.mubr.f32.gmra.mxu0 %v774
        %v2017 = vpop.f32.mrf.mxu0
        %v2018 = vadd.f32 0.0, %v2017
        %v2019 = vpop.f32.mrf.mxu0
        %2020 = vmatprep.mubr.f32.mxu0 0.0
        %2021 = vmatmul.mubr.f32.gmra.mxu0 %v775
        %v2022 = vpop.f32.mrf.mxu0
        %v2023 = vadd.f32 0.0, %v2022
        %v2024 = vpop.f32.mrf.mxu0
        %2025 = vdwg.mxu0
        %2027 = vset.pattern.permute.xlu0 24
        %2028 = vperm.xlu0 %2027, %v520
        %v2029 = vpop.permute.xlu0 %2028
        %2032 = vset.pattern.permute.xlu0 24
        %2033 = vperm.xlu0 %2032, %v521
        %v2034 = vpop.permute.xlu0 %2033
        %2037 = vset.pattern.permute.xlu0 24
        %2038 = vperm.xlu0 %2037, %v522
        %v2039 = vpop.permute.xlu0 %2038
        %2042 = vset.pattern.permute.xlu0 24
        %2043 = vperm.xlu0 %2042, %v523
        %v2044 = vpop.permute.xlu0 %2043
        %2047 = vset.pattern.permute.xlu0 24
        %2048 = vperm.xlu0 %2047, %v524
        %v2049 = vpop.permute.xlu0 %2048
        %2052 = vset.pattern.permute.xlu0 24
        %2053 = vperm.xlu0 %2052, %v525
        %v2054 = vpop.permute.xlu0 %2053
        %2057 = vset.pattern.permute.xlu0 24
        %2058 = vperm.xlu0 %2057, %v526
        %v2059 = vpop.permute.xlu0 %2058
        %2062 = vset.pattern.permute.xlu0 24
        %2063 = vperm.xlu0 %2062, %v527
        %v2064 = vpop.permute.xlu0 %2063
        %v2066 = vmul.f32 %v520, %v2029
        %v2067 = vmul.f32 %v521, %v2034
        %v2068 = vmul.f32 %v522, %v2039
        %v2069 = vmul.f32 %v523, %v2044
        %v2070 = vmul.f32 %v524, %v2049
        %v2071 = vmul.f32 %v525, %v2054
        %v2072 = vmul.f32 %v526, %v2059
        %v2073 = vmul.f32 %v527, %v2064
        %v2074 = vld [vmem:[%s9] sm:$0xff]
        %v2075 = vld [vmem:[%s9 + $0x8] sm:$0xff]
        %v2076 = vld [vmem:[%s10] sm:$0xff]
        %v2077 = vld [vmem:[%s10 + $0x8] sm:$0xff]
        %vm2078 = vcmask 130048
        %v2080 = vsel %vm2078, %v1988, 0
        %v2083 = vsel %vm2078, %v1993, 0
        %v2086 = vsel %vm2078, %v1998, 0
        %v2089 = vsel %vm2078, %v2003, 0
        %v2092 = vsel %vm2078, %v2008, 0
        %v2095 = vsel %vm2078, %v2013, 0
        %v2098 = vsel %vm2078, %v2018, 0
        %v2101 = vsel %vm2078, %v2023, 0
        %2103 = vmatprep.subr.mxu0 0.0
        %2104 = vmatpush1.msra.mxu0 0.0
        %2105 = vmatprep.subr.mxu0 0.0
        %2106 = vmatpush1.msra.mxu0 0.0
        %2107 = vmatprep.subr.mxu0 0.0
        %2108 = vmatpush1.msra.mxu0 0.0
        %2109 = vmatprep.subr.mxu0 0.0
        %2110 = vmatpush1.msra.mxu0 0.0
        %2111 = vmatprep.subr.mxu0 0.0
        %2112 = vmatpush1.msra.mxu0 0.0
        %2113 = vmatprep.subr.mxu0 0.0
        %2114 = vmatpush1.msra.mxu0 0.0
        %2115 = vmatprep.subr.mxu0 0.0
        %2116 = vmatpush1.msra.mxu0 0.0
        %2117 = vmatprep.subr.mxu0 0.0
        %2118 = vmatpush1.msra.mxu0 0.0
        %2119 = vmatprep.subr.mxu0 0.0
        %2120 = vmatpush1.msra.mxu0 0.0
        %2121 = vmatprep.subr.mxu0 0.0
        %2122 = vmatpush1.msra.mxu0 0.0
        %2123 = vmatprep.subr.mxu0 0.0
        %2124 = vmatpush1.msra.mxu0 0.0
        %2125 = vmatprep.subr.mxu0 0.0
        %2126 = vmatpush1.msra.mxu0 0.0
        %2127 = vmatprep.subr.mxu0 0.0
        %2128 = vmatpush1.msra.mxu0 0.0
        %2129 = vmatprep.subr.mxu0 0.0
        %2130 = vmatpush1.msra.mxu0 0.0
        %2131 = vmatprep.subr.mxu0 0.0
        %2132 = vmatpush1.msra.mxu0 %v2077
        %2133 = vmatprep.subr.mxu0 0.0
        %2134 = vmatpush1.msra.mxu0 %v2076
        %2135 = vmatprep.subr.mxu0 0.0
        %2136 = vmatpush2.msra.mxu0 0.0
        %2137 = vmatprep.subr.mxu0 0.0
        %2138 = vmatpush2.msra.mxu0 0.0
        %2139 = vmatprep.subr.mxu0 0.0
        %2140 = vmatpush2.msra.mxu0 0.0
        %2141 = vmatprep.subr.mxu0 0.0
        %2142 = vmatpush2.msra.mxu0 0.0
        %2143 = vmatprep.subr.mxu0 0.0
        %2144 = vmatpush2.msra.mxu0 0.0
        %2145 = vmatprep.subr.mxu0 0.0
        %2146 = vmatpush2.msra.mxu0 0.0
        %2147 = vmatprep.subr.mxu0 0.0
        %2148 = vmatpush2.msra.mxu0 0.0
        %2149 = vmatprep.subr.mxu0 0.0
        %2150 = vmatpush2.msra.mxu0 0.0
        %2151 = vmatprep.subr.mxu0 0.0
        %2152 = vmatpush2.msra.mxu0 0.0
        %2153 = vmatprep.subr.mxu0 0.0
        %2154 = vmatpush2.msra.mxu0 0.0
        %2155 = vmatprep.subr.mxu0 0.0
        %2156 = vmatpush2.msra.mxu0 0.0
        %2157 = vmatprep.subr.mxu0 0.0
        %2158 = vmatpush2.msra.mxu0 0.0
        %2159 = vmatprep.subr.mxu0 0.0
        %2160 = vmatpush2.msra.mxu0 0.0
        %2161 = vmatprep.subr.mxu0 0.0
        %2162 = vmatpush2.msra.mxu0 0.0
        %2163 = vmatprep.subr.mxu0 0.0
        %2164 = vmatpush2.msra.mxu0 0.0
        %2165 = vmatprep.subr.mxu0 0.0
        %2166 = vmatpush2.msra.mxu0 0.0
        %2167 = vmatprep.mubr.f32.mxu0 0.0
        %2168 = vmatmul.mubr.f32.gmra.mxu0 %v2080
        %v2169 = vpop.f32.mrf.mxu0
        %v2170 = vadd.f32 0.0, %v2169
        %v2171 = vpop.f32.mrf.mxu0
        %2172 = vmatprep.mubr.f32.mxu0 0.0
        %2173 = vmatmul.mubr.f32.gmra.mxu0 %v2083
        %v2174 = vpop.f32.mrf.mxu0
        %v2175 = vadd.f32 0.0, %v2174
        %v2176 = vpop.f32.mrf.mxu0
        %2177 = vmatprep.mubr.f32.mxu0 0.0
        %2178 = vmatmul.mubr.f32.gmra.mxu0 %v2086
        %v2179 = vpop.f32.mrf.mxu0
        %v2180 = vadd.f32 0.0, %v2179
        %v2181 = vpop.f32.mrf.mxu0
        %2182 = vmatprep.mubr.f32.mxu0 0.0
        %2183 = vmatmul.mubr.f32.gmra.mxu0 %v2089
        %v2184 = vpop.f32.mrf.mxu0
        %v2185 = vadd.f32 0.0, %v2184
        %v2186 = vpop.f32.mrf.mxu0
        %2187 = vmatprep.mubr.f32.mxu0 0.0
        %2188 = vmatmul.mubr.f32.gmra.mxu0 %v2092
        %v2189 = vpop.f32.mrf.mxu0
        %v2190 = vadd.f32 0.0, %v2189
        %v2191 = vpop.f32.mrf.mxu0
        %2192 = vmatprep.mubr.f32.mxu0 0.0
        %2193 = vmatmul.mubr.f32.gmra.mxu0 %v2095
        %v2194 = vpop.f32.mrf.mxu0
        %v2195 = vadd.f32 0.0, %v2194
        %v2196 = vpop.f32.mrf.mxu0
        %2197 = vmatprep.mubr.f32.mxu0 0.0
        %2198 = vmatmul.mubr.f32.gmra.mxu0 %v2098
        %v2199 = vpop.f32.mrf.mxu0
        %v2200 = vadd.f32 0.0, %v2199
        %v2201 = vpop.f32.mrf.mxu0
        %2202 = vmatprep.mubr.f32.mxu0 0.0
        %2203 = vmatmul.mubr.f32.gmra.mxu0 %v2101
        %v2204 = vpop.f32.mrf.mxu0
        %v2205 = vadd.f32 0.0, %v2204
        %v2206 = vpop.f32.mrf.mxu0
        %2207 = vdwg.mxu0
        %v2209 = vsel %vm2078, %v2066, 0
        %v2212 = vsel %vm2078, %v2067, 0
        %v2215 = vsel %vm2078, %v2068, 0
        %v2218 = vsel %vm2078, %v2069, 0
        %v2221 = vsel %vm2078, %v2070, 0
        %v2224 = vsel %vm2078, %v2071, 0
        %v2227 = vsel %vm2078, %v2072, 0
        %v2230 = vsel %vm2078, %v2073, 0
        %2232 = vmatprep.subr.mxu0 0.0
        %2233 = vmatpush1.msra.mxu0 0.0
        %2234 = vmatprep.subr.mxu0 0.0
        %2235 = vmatpush1.msra.mxu0 0.0
        %2236 = vmatprep.subr.mxu0 0.0
        %2237 = vmatpush1.msra.mxu0 0.0
        %2238 = vmatprep.subr.mxu0 0.0
        %2239 = vmatpush1.msra.mxu0 0.0
        %2240 = vmatprep.subr.mxu0 0.0
        %2241 = vmatpush1.msra.mxu0 0.0
        %2242 = vmatprep.subr.mxu0 0.0
        %2243 = vmatpush1.msra.mxu0 0.0
        %2244 = vmatprep.subr.mxu0 0.0
        %2245 = vmatpush1.msra.mxu0 0.0
        %2246 = vmatprep.subr.mxu0 0.0
        %2247 = vmatpush1.msra.mxu0 0.0
        %2248 = vmatprep.subr.mxu0 0.0
        %2249 = vmatpush1.msra.mxu0 0.0
        %2250 = vmatprep.subr.mxu0 0.0
        %2251 = vmatpush1.msra.mxu0 0.0
        %2252 = vmatprep.subr.mxu0 0.0
        %2253 = vmatpush1.msra.mxu0 0.0
        %2254 = vmatprep.subr.mxu0 0.0
        %2255 = vmatpush1.msra.mxu0 0.0
        %2256 = vmatprep.subr.mxu0 0.0
        %2257 = vmatpush1.msra.mxu0 0.0
        %2258 = vmatprep.subr.mxu0 0.0
        %2259 = vmatpush1.msra.mxu0 0.0
        %2260 = vmatprep.subr.mxu0 0.0
        %2261 = vmatpush1.msra.mxu0 %v2075
        %2262 = vmatprep.subr.mxu0 0.0
        %2263 = vmatpush1.msra.mxu0 %v2074
        %2264 = vmatprep.subr.mxu0 0.0
        %2265 = vmatpush2.msra.mxu0 0.0
        %2266 = vmatprep.subr.mxu0 0.0
        %2267 = vmatpush2.msra.mxu0 0.0
        %2268 = vmatprep.subr.mxu0 0.0
        %2269 = vmatpush2.msra.mxu0 0.0
        %2270 = vmatprep.subr.mxu0 0.0
        %2271 = vmatpush2.msra.mxu0 0.0
        %2272 = vmatprep.subr.mxu0 0.0
        %2273 = vmatpush2.msra.mxu0 0.0
        %2274 = vmatprep.subr.mxu0 0.0
        %2275 = vmatpush2.msra.mxu0 0.0
        %2276 = vmatprep.subr.mxu0 0.0
        %2277 = vmatpush2.msra.mxu0 0.0
        %2278 = vmatprep.subr.mxu0 0.0
        %2279 = vmatpush2.msra.mxu0 0.0
        %2280 = vmatprep.subr.mxu0 0.0
        %2281 = vmatpush2.msra.mxu0 0.0
        %2282 = vmatprep.subr.mxu0 0.0
        %2283 = vmatpush2.msra.mxu0 0.0
        %2284 = vmatprep.subr.mxu0 0.0
        %2285 = vmatpush2.msra.mxu0 0.0
        %2286 = vmatprep.subr.mxu0 0.0
        %2287 = vmatpush2.msra.mxu0 0.0
        %2288 = vmatprep.subr.mxu0 0.0
        %2289 = vmatpush2.msra.mxu0 0.0
        %2290 = vmatprep.subr.mxu0 0.0
        %2291 = vmatpush2.msra.mxu0 0.0
        %2292 = vmatprep.subr.mxu0 0.0
        %2293 = vmatpush2.msra.mxu0 0.0
        %2294 = vmatprep.subr.mxu0 0.0
        %2295 = vmatpush2.msra.mxu0 0.0
        %2296 = vmatprep.mubr.f32.mxu0 0.0
        %2297 = vmatmul.mubr.f32.gmra.mxu0 %v2209
        %v2298 = vpop.f32.mrf.mxu0
        %v2299 = vadd.f32 %v2170, %v2298
        %v2300 = vpop.f32.mrf.mxu0
        %2301 = vmatprep.mubr.f32.mxu0 0.0
        %2302 = vmatmul.mubr.f32.gmra.mxu0 %v2212
        %v2303 = vpop.f32.mrf.mxu0
        %v2304 = vadd.f32 %v2175, %v2303
        %v2305 = vpop.f32.mrf.mxu0
        %2306 = vmatprep.mubr.f32.mxu0 0.0
        %2307 = vmatmul.mubr.f32.gmra.mxu0 %v2215
        %v2308 = vpop.f32.mrf.mxu0
        %v2309 = vadd.f32 %v2180, %v2308
        %v2310 = vpop.f32.mrf.mxu0
        %2311 = vmatprep.mubr.f32.mxu0 0.0
        %2312 = vmatmul.mubr.f32.gmra.mxu0 %v2218
        %v2313 = vpop.f32.mrf.mxu0
        %v2314 = vadd.f32 %v2185, %v2313
        %v2315 = vpop.f32.mrf.mxu0
        %2316 = vmatprep.mubr.f32.mxu0 0.0
        %2317 = vmatmul.mubr.f32.gmra.mxu0 %v2221
        %v2318 = vpop.f32.mrf.mxu0
        %v2319 = vadd.f32 %v2190, %v2318
        %v2320 = vpop.f32.mrf.mxu0
        %2321 = vmatprep.mubr.f32.mxu0 0.0
        %2322 = vmatmul.mubr.f32.gmra.mxu0 %v2224
        %v2323 = vpop.f32.mrf.mxu0
        %v2324 = vadd.f32 %v2195, %v2323
        %v2325 = vpop.f32.mrf.mxu0
        %2326 = vmatprep.mubr.f32.mxu0 0.0
        %2327 = vmatmul.mubr.f32.gmra.mxu0 %v2227
        %v2328 = vpop.f32.mrf.mxu0
        %v2329 = vadd.f32 %v2200, %v2328
        %v2330 = vpop.f32.mrf.mxu0
        %2331 = vmatprep.mubr.f32.mxu0 0.0
        %2332 = vmatmul.mubr.f32.gmra.mxu0 %v2230
        %v2333 = vpop.f32.mrf.mxu0
        %v2334 = vadd.f32 %v2205, %v2333
        %v2335 = vpop.f32.mrf.mxu0
        %2336 = vdwg.mxu0
        %v2337 = vld [vmem:[%s11] sm:$0x1]
        %v2339 = vlaneseq
        %v2340 = vshrl.u32 %v2339, 7
        %v2341 = vsub.s32 0, %v2340
        %v2342 = vrot.slane %v2337, %v2341
        %v2344 = vadd.f32 %v2299, %v2342
        %v2345 = vadd.f32 %v2304, %v2342
        %v2346 = vadd.f32 %v2309, %v2342
        %v2347 = vadd.f32 %v2314, %v2342
        %v2348 = vadd.f32 %v2319, %v2342
        %v2349 = vadd.f32 %v2324, %v2342
        %v2350 = vadd.f32 %v2329, %v2342
        %v2351 = vadd.f32 %v2334, %v2342
        %v2352 = vmax.f32 %v2344, 0.0
        %v2353 = vmax.f32 %v2345, 0.0
        %v2354 = vmax.f32 %v2346, 0.0
        %v2355 = vmax.f32 %v2347, 0.0
        %v2356 = vmax.f32 %v2348, 0.0
        %v2357 = vmax.f32 %v2349, 0.0
        %v2358 = vmax.f32 %v2350, 0.0
        %v2359 = vmax.f32 %v2351, 0.0
        %v2360 = vld [vmem:[%s12] sm:$0xff]
        %v2361 = vld [vmem:[%s12 + $0x8] sm:$0xff]
        %v2362 = vld [vmem:[%s12 + $0x10] sm:$0xff]
        %v2363 = vld [vmem:[%s12 + $0x18] sm:$0xff]
        %v2364 = vld [vmem:[%s13] sm:$0x1]
        %v2366 = vlaneseq
        %v2367 = vshrl.u32 %v2366, 7
        %v2368 = vsub.s32 0, %v2367
        %v2369 = vrot.slane %v2364, %v2368
        %v2372 = vsel %vm1615, %v2352, 0
        %v2375 = vsel %vm1615, %v2353, 0
        %v2378 = vsel %vm1615, %v2354, 0
        %v2381 = vsel %vm1615, %v2355, 0
        %v2384 = vsel %vm1615, %v2356, 0
        %v2387 = vsel %vm1615, %v2357, 0
        %v2390 = vsel %vm1615, %v2358, 0
        %v2393 = vsel %vm1615, %v2359, 0
        %2395 = vmatprep.subr.mxu0 0.0
        %2396 = vmatpush1.msra.mxu0 0.0
        %2397 = vmatprep.subr.mxu0 0.0
        %2398 = vmatpush1.msra.mxu0 0.0
        %2399 = vmatprep.subr.mxu0 0.0
        %2400 = vmatpush1.msra.mxu0 0.0
        %2401 = vmatprep.subr.mxu0 0.0
        %2402 = vmatpush1.msra.mxu0 0.0
        %2403 = vmatprep.subr.mxu0 0.0
        %2404 = vmatpush1.msra.mxu0 0.0
        %2405 = vmatprep.subr.mxu0 0.0
        %2406 = vmatpush1.msra.mxu0 0.0
        %2407 = vmatprep.subr.mxu0 0.0
        %2408 = vmatpush1.msra.mxu0 0.0
        %2409 = vmatprep.subr.mxu0 0.0
        %2410 = vmatpush1.msra.mxu0 0.0
        %2411 = vmatprep.subr.mxu0 0.0
        %2412 = vmatpush1.msra.mxu0 0.0
        %2413 = vmatprep.subr.mxu0 0.0
        %2414 = vmatpush1.msra.mxu0 0.0
        %2415 = vmatprep.subr.mxu0 0.0
        %2416 = vmatpush1.msra.mxu0 0.0
        %2417 = vmatprep.subr.mxu0 0.0
        %2418 = vmatpush1.msra.mxu0 0.0
        %2419 = vmatprep.subr.mxu0 0.0
        %2420 = vmatpush1.msra.mxu0 %v2363
        %2421 = vmatprep.subr.mxu0 0.0
        %2422 = vmatpush1.msra.mxu0 %v2362
        %2423 = vmatprep.subr.mxu0 0.0
        %2424 = vmatpush1.msra.mxu0 %v2361
        %2425 = vmatprep.subr.mxu0 0.0
        %2426 = vmatpush1.msra.mxu0 %v2360
        %2427 = vmatprep.subr.mxu0 0.0
        %2428 = vmatpush2.msra.mxu0 0.0
        %2429 = vmatprep.subr.mxu0 0.0
        %2430 = vmatpush2.msra.mxu0 0.0
        %2431 = vmatprep.subr.mxu0 0.0
        %2432 = vmatpush2.msra.mxu0 0.0
        %2433 = vmatprep.subr.mxu0 0.0
        %2434 = vmatpush2.msra.mxu0 0.0
        %2435 = vmatprep.subr.mxu0 0.0
        %2436 = vmatpush2.msra.mxu0 0.0
        %2437 = vmatprep.subr.mxu0 0.0
        %2438 = vmatpush2.msra.mxu0 0.0
        %2439 = vmatprep.subr.mxu0 0.0
        %2440 = vmatpush2.msra.mxu0 0.0
        %2441 = vmatprep.subr.mxu0 0.0
        %2442 = vmatpush2.msra.mxu0 0.0
        %2443 = vmatprep.subr.mxu0 0.0
        %2444 = vmatpush2.msra.mxu0 0.0
        %2445 = vmatprep.subr.mxu0 0.0
        %2446 = vmatpush2.msra.mxu0 0.0
        %2447 = vmatprep.subr.mxu0 0.0
        %2448 = vmatpush2.msra.mxu0 0.0
        %2449 = vmatprep.subr.mxu0 0.0
        %2450 = vmatpush2.msra.mxu0 0.0
        %2451 = vmatprep.subr.mxu0 0.0
        %2452 = vmatpush2.msra.mxu0 0.0
        %2453 = vmatprep.subr.mxu0 0.0
        %2454 = vmatpush2.msra.mxu0 0.0
        %2455 = vmatprep.subr.mxu0 0.0
        %2456 = vmatpush2.msra.mxu0 0.0
        %2457 = vmatprep.subr.mxu0 0.0
        %2458 = vmatpush2.msra.mxu0 0.0
        %2459 = vmatprep.mubr.f32.mxu0 0.0
        %2460 = vmatmul.mubr.f32.gmra.mxu0 %v2372
        %v2461 = vpop.f32.mrf.mxu0
        %v2462 = vadd.f32 %v2369, %v2461
        %v2463 = vpop.f32.mrf.mxu0
        %2464 = vmatprep.mubr.f32.mxu0 0.0
        %2465 = vmatmul.mubr.f32.gmra.mxu0 %v2375
        %v2466 = vpop.f32.mrf.mxu0
        %v2467 = vadd.f32 %v2369, %v2466
        %v2468 = vpop.f32.mrf.mxu0
        %2469 = vmatprep.mubr.f32.mxu0 0.0
        %2470 = vmatmul.mubr.f32.gmra.mxu0 %v2378
        %v2471 = vpop.f32.mrf.mxu0
        %v2472 = vadd.f32 %v2369, %v2471
        %v2473 = vpop.f32.mrf.mxu0
        %2474 = vmatprep.mubr.f32.mxu0 0.0
        %2475 = vmatmul.mubr.f32.gmra.mxu0 %v2381
        %v2476 = vpop.f32.mrf.mxu0
        %v2477 = vadd.f32 %v2369, %v2476
        %v2478 = vpop.f32.mrf.mxu0
        %2479 = vmatprep.mubr.f32.mxu0 0.0
        %2480 = vmatmul.mubr.f32.gmra.mxu0 %v2384
        %v2481 = vpop.f32.mrf.mxu0
        %v2482 = vadd.f32 %v2369, %v2481
        %v2483 = vpop.f32.mrf.mxu0
        %2484 = vmatprep.mubr.f32.mxu0 0.0
        %2485 = vmatmul.mubr.f32.gmra.mxu0 %v2387
        %v2486 = vpop.f32.mrf.mxu0
        %v2487 = vadd.f32 %v2369, %v2486
        %v2488 = vpop.f32.mrf.mxu0
        %2489 = vmatprep.mubr.f32.mxu0 0.0
        %2490 = vmatmul.mubr.f32.gmra.mxu0 %v2390
        %v2491 = vpop.f32.mrf.mxu0
        %v2492 = vadd.f32 %v2369, %v2491
        %v2493 = vpop.f32.mrf.mxu0
        %2494 = vmatprep.mubr.f32.mxu0 0.0
        %2495 = vmatmul.mubr.f32.gmra.mxu0 %v2393
        %v2496 = vpop.f32.mrf.mxu0
        %v2497 = vadd.f32 %v2369, %v2496
        %v2498 = vpop.f32.mrf.mxu0
        %2499 = vdwg.mxu0
        %2500 = vst [vmem:[%s501] sm:$0xff] %v2462
        %2501 = vst [vmem:[%s501 + $0x8] sm:$0xff] %v2467
        %2502 = vst [vmem:[%s501 + $0x10] sm:$0xff] %v2472
        %2503 = vst [vmem:[%s501 + $0x18] sm:$0xff] %v2477
        %2504 = vst [vmem:[%s501 + $0x20] sm:$0xff] %v2482
        %2505 = vst [vmem:[%s501 + $0x28] sm:$0xff] %v2487
        %2506 = vst [vmem:[%s501 + $0x30] sm:$0xff] %v2492
        %2507 = vst [vmem:[%s501 + $0x38] sm:$0xff] %v2497
        %s2508 = sand.u32 %s350, 1
        %s2509 = scalar_lea.sflag [#allocation3], %s2508
        %s2510 = sand.u32 %s350, 1
        %s2511 = smul.addr %s2510, 64
        %s2512 = scalar_lea.vmem [#allocation2], %s2511
        // Predicated region
        $region77: #{tpu_custom_call.1} parent=75 // pred_check
          %p2513 = pneg %p360
        $region78: #{tpu_custom_call.1} parent=75 // pred_check_branch
          %2515 = sbr.rel (%p2513) target = $region80
        $region79: #{tpu_custom_call.1} parent=75 // pred_region
          %s2517 = ssub.s32 1024, 1024
          %2518 = vsyncadd %s2509, %s2517
          %s2519 = smul.addr %s28, 8
          %s2520 = smul.addr %s2519, 128
          %s2521 = scalar_lea.hbm %s14, %s2520
          %s2522 = sshll.u32 %s2512, 4
          %s2523 = int_to_ptr.vmem [resolvable:$true] %s2522
          %2528 = dma.vmem_to_hbm [thread:$0]  %s2523, 1024, %s2521, %s2509, 128, 128, 8
        $region80: #{tpu_custom_call.1} parent=75 // pred_fallthru
          _
      $region76: #{tpu_custom_call.1} parent=5 // pred_fallthru
        _
      %p2529 = scmp.le.s32.totalorder 2, %s23
      // Predicated region
      $region81: #{tpu_custom_call.1} parent=5 // pred_check
        %p2530 = pneg %p2529
      $region82: #{tpu_custom_call.1} parent=5 // pred_check_branch
        %2532 = sbr.rel (%p2530) target = $region84
      $region83: #{tpu_custom_call.1} parent=5 // pred_region
        %s2533 = ssub.s32 %s23, 2
        // Predicated region
        $region85: #{tpu_custom_call.1} parent=83 // pred_check
          %p2534 = pneg %p366
        $region86: #{tpu_custom_call.1} parent=83 // pred_check_branch
          %2536 = sbr.rel (%p2534) target = $region88
        $region87: #{tpu_custom_call.1} parent=83 // pred_region
          %s2537 = sand.u32 %s351, 1
          %s2538 = scalar_lea.sflag [#allocation3], %s2537
          %s2539 = sand.u32 %s351, 1
          %s2540 = smul.addr %s2539, 64
          %s2541 = scalar_lea.vmem [#allocation2], %s2540
          %2542 = dma.done %s2538, 1024
        $region88: #{tpu_custom_call.1} parent=83 // pred_fallthru
          _
      $region84: #{tpu_custom_call.1} parent=5 // pred_fallthru
        _
    $region6: #{tpu_custom_call.1} parent=1 // loop_footer
      %s27 = sadd.s32 1, %s23
    $region7: #{tpu_custom_call.1} parent=1 // loop_footer_branch
      %22 = sbr.rel target = $region3
    $region8: #{tpu_custom_call.1} parent=1 // loop_exit
      _
    %2543 = vsyncpa [#allocation3], 1
    %s2544 = scalar_lea.sflag [#allocation3], 1
    %2545 = vsyncpa %s2544, 1

</llo_original>
